<compile_context>
chip_gen: v7x
topology: tpu7x:2x2x1
jax: 0.10.0
libtpu: 0.0.40
codegen_flags: <defaults>
</compile_context>

<pallas_src>
import jax
import jax.numpy as jnp
from jax.experimental import pallas as pl
from jax.experimental.pallas import tpu as pltpu  # noqa: F401  (kept for TPU-specific tuning hooks)

# ---------------- configuration (small, forward-consistent shapes) ----------
B = 2            # batch
H = W = 16       # spatial
P = H * W        # pixels per image (256)
N_ROWS = B * P   # total pixel rows (512)
C_FEAT = 32      # feature channels (struct_f / r_f / seg_f)
C_HM = 21        # heatmap channels (21 hand joints)
C_HM_PAD = 32    # hm channels padded to a lane/sublane-friendly contraction dim
C_SEG_EMB = 32   # segmentation-class embedding dim
N_SEG_CLS = 4    # number of segmentation classes
SEG_PAD = 8      # one-hot padded class count (sublane-friendly)
E_DIM = 64       # mano encoding dim
HID = 128        # regressor hidden dim
N_POSE = 48      # MANO pose params
N_SHAPE = 10     # MANO shape params
HEAD_PAD = 128   # lane-dense merged head output: [pose | shape | 0]


# ---------------- single fused Pallas kernel ---------------------------------
def _decent2fine_kernel(seg_idx_ref, seg_prob_ref, hm_ref, st_ref, r_ref,
                        seg_cw_ref, seg_b_ref,
                        hm_w_ref, hm_b_ref,
                        w_er_ref, b_er_ref,
                        wh_ref, bh_ref,
                        o_ref):
    n = hm_ref.shape[0]                                        # B*H*W rows

    # --- seg_emb: one-hot(class) * prob, through (table @ seg_w) composed 1x1 conv
    cls_iota = jax.lax.broadcasted_iota(jnp.int32, (n, SEG_PAD), 1)
    onehot = (cls_iota == seg_idx_ref[...]).astype(jnp.float32)   # (N, 8)
    seg_in = onehot * seg_prob_ref[...]                           # scale by confidence
    seg_f = jnp.maximum(
        jnp.dot(seg_in, seg_cw_ref[...], preferred_element_type=jnp.float32)
        + seg_b_ref[...], 0.0)                                    # (N, 32)

    # --- hand_Encoder fusion: hm 1x1 conv + struct + r + seg, ReLU
    fused = jnp.maximum(
        jnp.dot(hm_ref[...], hm_w_ref[...], preferred_element_type=jnp.float32)
        + st_ref[...] + r_ref[...] + seg_f + hm_b_ref[...], 0.0)  # (N, 32)

    # --- per-image global average pool as an MXU matmul with an in-kernel
    #     (B, N) block-diagonal 1/P matrix (built from iota compares).
    pix = jax.lax.broadcasted_iota(jnp.int32, (B, n), 1)
    img = jax.lax.broadcasted_iota(jnp.int32, (B, n), 0)
    in_img = jnp.logical_and(pix >= img * P, pix < (img + 1) * P)
    pool = in_img.astype(jnp.float32) * (1.0 / float(P))          # (B, N)
    pooled = jnp.dot(pool, fused, preferred_element_type=jnp.float32)   # (B, 32)

    # --- encoder FC composed with the regressor's first layer (no activation
    #     between them in the reference), ReLU.
    hmid = jnp.maximum(
        jnp.dot(pooled, w_er_ref[...], preferred_element_type=jnp.float32)
        + b_er_ref[...], 0.0)                                     # (B, 128)

    # --- merged lane-dense (pose | shape | pad) regression head
    o_ref[...] = jnp.dot(hmid, wh_ref[...],
                         preferred_element_type=jnp.float32) + bh_ref[...]  # (B, 128)


def decent2fine_fused(seg_idx_flat, seg_prob_flat, hm_rows, st_rows, r_rows, packed):
    # Whole problem fits in VMEM (< 300 KB): no grid, no pipelining needed;
    # every input/output is a single full-array block.
    return pl.pallas_call(
        _decent2fine_kernel,
        out_shape=jax.ShapeDtypeStruct((B, HEAD_PAD), jnp.float32),
    )(seg_idx_flat, seg_prob_flat, hm_rows, st_rows, r_rows,
      packed["seg_cw"], packed["seg_b"],
      packed["hm_w"], packed["hm_b"],
      packed["w_er"], packed["b_er"],
      packed["w_head"], packed["b_head"])


# ---------------- deterministic parameter init -------------------------------
def init_params(key):
    ks = jax.random.split(key, 10)
    scale = 0.05
    return {
        "seg_emb_table": scale * jax.random.normal(ks[0], (N_SEG_CLS, C_SEG_EMB), jnp.float32),
        "seg_w": scale * jax.random.normal(ks[1], (C_SEG_EMB, C_FEAT), jnp.float32),
        "seg_b": jnp.zeros((1, C_FEAT), jnp.float32),
        "hm_w": scale * jax.random.normal(ks[2], (C_HM, C_FEAT), jnp.float32),
        "hm_b": jnp.zeros((1, 1, C_FEAT), jnp.float32),
        "fc_w": scale * jax.random.normal(ks[3], (C_FEAT, E_DIM), jnp.float32),
        "fc_b": jnp.zeros((1, E_DIM), jnp.float32),
        "reg_w1": scale * jax.random.normal(ks[4], (E_DIM, HID), jnp.float32),
        "reg_b1": jnp.zeros((1, HID), jnp.float32),
        "pose_w": scale * jax.random.normal(ks[5], (HID, N_POSE), jnp.float32),
        "pose_b": jnp.zeros((1, N_POSE), jnp.float32),
        "shape_w": scale * jax.random.normal(ks[6], (HID, N_SHAPE), jnp.float32),
        "shape_b": jnp.zeros((1, N_SHAPE), jnp.float32),
    }


def pack_params(p):
    """One-time (outside jit) composition / padding of weights for the fused kernel."""
    # seg: pad class table to 8 rows and compose with the 1x1-conv weight.
    table_pad = jnp.concatenate(
        [p["seg_emb_table"],
         jnp.zeros((SEG_PAD - N_SEG_CLS, C_SEG_EMB), jnp.float32)], axis=0)
    seg_cw = table_pad @ p["seg_w"]                                    # (8, 32)
    # hm 1x1-conv weight padded on the contraction dim (21 -> 32).
    hm_w_pad = jnp.concatenate(
        [p["hm_w"], jnp.zeros((C_HM_PAD - C_HM, C_FEAT), jnp.float32)], axis=0)
    hm_b = p["hm_b"].reshape(1, C_FEAT)
    # encoder FC (no activation) composed with the first regressor layer.
    w_er = p["fc_w"] @ p["reg_w1"]                                     # (32, 128)
    b_er = p["fc_b"].reshape(1, E_DIM) @ p["reg_w1"] + p["reg_b1"]     # (1, 128)
    # merged lane-dense regression head: [pose_w | shape_w | zero-pad].
    w_head = jnp.concatenate(
        [p["pose_w"], p["shape_w"],
         jnp.zeros((HID, HEAD_PAD - N_POSE - N_SHAPE), jnp.float32)], axis=1)
    b_head = jnp.concatenate(
        [p["pose_b"], p["shape_b"],
         jnp.zeros((1, HEAD_PAD - N_POSE - N_SHAPE), jnp.float32)], axis=1)
    return {
        "seg_cw": seg_cw, "seg_b": p["seg_b"],
        "hm_w": hm_w_pad, "hm_b": hm_b,
        "w_er": w_er, "b_er": b_er,
        "w_head": w_head, "b_head": b_head,
    }


# ---------------- Decent2Fine forward ----------------------------------------
@jax.jit
def decent2fine_forward(packed, struct_f, out_hm, seg_idx, seg_prob, r_f,
                        gt_mano_params):
    b, _, h, w = struct_f.shape
    n = b * h * w

    def to_rows(x):  # NCHW -> (B*H*W, C): pixels-as-rows, channels-on-lanes
        return jnp.transpose(x, (0, 2, 3, 1)).reshape(n, x.shape[1])

    hm_rows = to_rows(out_hm)
    hm_rows = jnp.pad(hm_rows, ((0, 0), (0, C_HM_PAD - C_HM)))          # (N, 32)
    st_rows = to_rows(struct_f)                                         # (N, 32)
    r_rows = to_rows(r_f)                                               # (N, 32)
    seg_idx_flat = seg_idx.reshape(n, 1).astype(jnp.int32)              # channel dim is 1
    seg_prob_flat = seg_prob.reshape(n, 1)

    out = decent2fine_fused(seg_idx_flat, seg_prob_flat,
                            hm_rows, st_rows, r_rows, packed)           # (B, 128)

    pred_mano_results = {"pose_params": out[:, :N_POSE],
                         "shape_params": out[:, N_POSE:N_POSE + N_SHAPE]}
    gt_mano_results = {"pose_params": gt_mano_params[:, :N_POSE],
                       "shape_params": gt_mano_params[:, N_POSE:N_POSE + N_SHAPE]}
    return pred_mano_results, gt_mano_results


# ---------------- main --------------------------------------------------------
if __name__ == "__main__":
    key = jax.random.PRNGKey(0)
    k_in = jax.random.split(key, 6)

    struct_f = jax.random.normal(k_in[0], (B, C_FEAT, H, W), jnp.float32)
    out_hm = jax.random.uniform(k_in[1], (B, C_HM, H, W), jnp.float32)
    seg_idx = jax.random.randint(k_in[2], (B, 1, H, W), 0, N_SEG_CLS, jnp.int32)
    seg_prob = jax.random.uniform(k_in[3], (B, 1, H, W), jnp.float32)
    r_f = jax.random.normal(k_in[4], (B, C_FEAT, H, W), jnp.float32)
    gt_mano_params = jax.random.normal(k_in[5], (B, N_POSE + N_SHAPE), jnp.float32)

    params = init_params(jax.random.PRNGKey(42))
    packed = pack_params(params)   # one-time weight composition, outside jit

    pred, gt = decent2fine_forward(packed, struct_f, out_hm, seg_idx, seg_prob,
                                   r_f, gt_mano_params)
    jax.block_until_ready(pred["pose_params"])
    jax.block_until_ready(pred["shape_params"])
    jax.block_until_ready(gt["pose_params"])

    assert pred["pose_params"].shape == (B, N_POSE)
    assert pred["shape_params"].shape == (B, N_SHAPE)
    assert gt["pose_params"].shape == (B, N_POSE)
    assert gt["shape_params"].shape == (B, N_SHAPE)
    print("KERNEL_OK")
</pallas_src>

<mosaic_0001>
module attributes {stable_mosaic.version = 11 : i64} {
  func.func @_decent2fine_kernel(%arg0: memref<512x1xi32, #tpu.memory_space<vmem>>, %arg1: memref<512x1xf32, #tpu.memory_space<vmem>>, %arg2: memref<512x32xf32, #tpu.memory_space<vmem>>, %arg3: memref<512x32xf32, #tpu.memory_space<vmem>>, %arg4: memref<512x32xf32, #tpu.memory_space<vmem>>, %arg5: memref<8x32xf32, #tpu.memory_space<vmem>>, %arg6: memref<1x32xf32, #tpu.memory_space<vmem>>, %arg7: memref<32x32xf32, #tpu.memory_space<vmem>>, %arg8: memref<1x32xf32, #tpu.memory_space<vmem>>, %arg9: memref<32x128xf32, #tpu.memory_space<vmem>>, %arg10: memref<1x128xf32, #tpu.memory_space<vmem>>, %arg11: memref<128x128xf32, #tpu.memory_space<vmem>>, %arg12: memref<1x128xf32, #tpu.memory_space<vmem>>, %arg13: memref<2x128xf32, #tpu.memory_space<vmem>>) attributes {dimension_semantics = [], scalar_prefetch = 0 : i64, scratch_operands = 0 : i64, tpu.core_type = #tpu.core_type<tc>} {
    %0 = tpu.iota {dimensions = array<i32: 1>} : vector<512x8xi32>
    %c0 = arith.constant 0 : index
    %c0_0 = arith.constant 0 : index
    %1 = vector.load %arg0[%c0, %c0_0] : memref<512x1xi32, #tpu.memory_space<vmem>>, vector<512x1xi32>
    %2 = vector.broadcast %1 : vector<512x1xi32> to vector<512x8xi32>
    %3 = arith.cmpi eq, %0, %2 : vector<512x8xi32>
    %4 = arith.extui %3 : vector<512x8xi1> to vector<512x8xi32>
    %5 = arith.sitofp %4 : vector<512x8xi32> to vector<512x8xf32>
    %c0_1 = arith.constant 0 : index
    %c0_2 = arith.constant 0 : index
    %6 = vector.load %arg1[%c0_1, %c0_2] : memref<512x1xf32, #tpu.memory_space<vmem>>, vector<512x1xf32>
    %7 = vector.broadcast %6 : vector<512x1xf32> to vector<512x8xf32>
    %8 = arith.mulf %5, %7 : vector<512x8xf32>
    %c0_3 = arith.constant 0 : index
    %c0_4 = arith.constant 0 : index
    %9 = vector.load %arg5[%c0_3, %c0_4] : memref<8x32xf32, #tpu.memory_space<vmem>>, vector<8x32xf32>
    %cst = arith.constant dense<0.000000e+00> : vector<512x32xf32>
    %10 = tpu.matmul %8, %9, %cst {dimension_numbers = #tpu.dot_dimension_numbers<[1], [0], [0], [1], [0, 0, 1, 1], [], []>} : vector<512x8xf32>, vector<8x32xf32>, vector<512x32xf32> -> vector<512x32xf32>
    %c0_5 = arith.constant 0 : index
    %c0_6 = arith.constant 0 : index
    %11 = vector.load %arg6[%c0_5, %c0_6] : memref<1x32xf32, #tpu.memory_space<vmem>>, vector<1x32xf32>
    %12 = vector.broadcast %11 : vector<1x32xf32> to vector<512x32xf32>
    %13 = arith.addf %10, %12 : vector<512x32xf32>
    %cst_7 = arith.constant 0.000000e+00 : f32
    %14 = vector.broadcast %cst_7 : f32 to vector<512x32xf32>
    %15 = arith.maximumf %13, %14 : vector<512x32xf32>
    %c0_8 = arith.constant 0 : index
    %c0_9 = arith.constant 0 : index
    %16 = vector.load %arg2[%c0_8, %c0_9] : memref<512x32xf32, #tpu.memory_space<vmem>>, vector<512x32xf32>
    %c0_10 = arith.constant 0 : index
    %c0_11 = arith.constant 0 : index
    %17 = vector.load %arg7[%c0_10, %c0_11] : memref<32x32xf32, #tpu.memory_space<vmem>>, vector<32x32xf32>
    %cst_12 = arith.constant dense<0.000000e+00> : vector<512x32xf32>
    %18 = tpu.matmul %16, %17, %cst_12 {dimension_numbers = #tpu.dot_dimension_numbers<[1], [0], [0], [1], [0, 0, 1, 1], [], []>} : vector<512x32xf32>, vector<32x32xf32>, vector<512x32xf32> -> vector<512x32xf32>
    %c0_13 = arith.constant 0 : index
    %c0_14 = arith.constant 0 : index
    %19 = vector.load %arg3[%c0_13, %c0_14] : memref<512x32xf32, #tpu.memory_space<vmem>>, vector<512x32xf32>
    %20 = arith.addf %18, %19 : vector<512x32xf32>
    %c0_15 = arith.constant 0 : index
    %c0_16 = arith.constant 0 : index
    %21 = vector.load %arg4[%c0_15, %c0_16] : memref<512x32xf32, #tpu.memory_space<vmem>>, vector<512x32xf32>
    %22 = arith.addf %20, %21 : vector<512x32xf32>
    %23 = arith.addf %22, %15 : vector<512x32xf32>
    %c0_17 = arith.constant 0 : index
    %c0_18 = arith.constant 0 : index
    %24 = vector.load %arg8[%c0_17, %c0_18] : memref<1x32xf32, #tpu.memory_space<vmem>>, vector<1x32xf32>
    %25 = vector.broadcast %24 : vector<1x32xf32> to vector<512x32xf32>
    %26 = arith.addf %23, %25 : vector<512x32xf32>
    %cst_19 = arith.constant 0.000000e+00 : f32
    %27 = vector.broadcast %cst_19 : f32 to vector<512x32xf32>
    %28 = arith.maximumf %26, %27 : vector<512x32xf32>
    %29 = tpu.iota {dimensions = array<i32: 1>} : vector<2x512xi32>
    %30 = tpu.iota {dimensions = array<i32: 0>} : vector<2x512xi32>
    %c256_i32 = arith.constant 256 : i32
    %31 = vector.broadcast %c256_i32 : i32 to vector<2x512xi32>
    %32 = arith.muli %30, %31 : vector<2x512xi32>
    %33 = arith.cmpi sge, %29, %32 : vector<2x512xi32>
    %c1_i32 = arith.constant 1 : i32
    %34 = vector.broadcast %c1_i32 : i32 to vector<2x512xi32>
    %35 = arith.addi %30, %34 : vector<2x512xi32>
    %c256_i32_20 = arith.constant 256 : i32
    %36 = vector.broadcast %c256_i32_20 : i32 to vector<2x512xi32>
    %37 = arith.muli %35, %36 : vector<2x512xi32>
    %38 = arith.cmpi slt, %29, %37 : vector<2x512xi32>
    %39 = arith.andi %33, %38 : vector<2x512xi1>
    %40 = arith.extui %39 : vector<2x512xi1> to vector<2x512xi32>
    %41 = arith.sitofp %40 : vector<2x512xi32> to vector<2x512xf32>
    %cst_21 = arith.constant 3.906250e-03 : f32
    %42 = vector.broadcast %cst_21 : f32 to vector<2x512xf32>
    %43 = arith.mulf %41, %42 : vector<2x512xf32>
    %cst_22 = arith.constant dense<0.000000e+00> : vector<2x32xf32>
    %44 = tpu.matmul %43, %28, %cst_22 {dimension_numbers = #tpu.dot_dimension_numbers<[1], [0], [0], [1], [0, 0, 1, 1], [], []>} : vector<2x512xf32>, vector<512x32xf32>, vector<2x32xf32> -> vector<2x32xf32>
    %c0_23 = arith.constant 0 : index
    %c0_24 = arith.constant 0 : index
    %45 = vector.load %arg9[%c0_23, %c0_24] : memref<32x128xf32, #tpu.memory_space<vmem>>, vector<32x128xf32>
    %cst_25 = arith.constant dense<0.000000e+00> : vector<2x128xf32>
    %46 = tpu.matmul %44, %45, %cst_25 {dimension_numbers = #tpu.dot_dimension_numbers<[1], [0], [0], [1], [0, 0, 1, 1], [], []>} : vector<2x32xf32>, vector<32x128xf32>, vector<2x128xf32> -> vector<2x128xf32>
    %c0_26 = arith.constant 0 : index
    %c0_27 = arith.constant 0 : index
    %47 = vector.load %arg10[%c0_26, %c0_27] : memref<1x128xf32, #tpu.memory_space<vmem>>, vector<1x128xf32>
    %48 = vector.broadcast %47 : vector<1x128xf32> to vector<2x128xf32>
    %49 = arith.addf %46, %48 : vector<2x128xf32>
    %cst_28 = arith.constant 0.000000e+00 : f32
    %50 = vector.broadcast %cst_28 : f32 to vector<2x128xf32>
    %51 = arith.maximumf %49, %50 : vector<2x128xf32>
    %c0_29 = arith.constant 0 : index
    %c0_30 = arith.constant 0 : index
    %52 = vector.load %arg11[%c0_29, %c0_30] : memref<128x128xf32, #tpu.memory_space<vmem>>, vector<128x128xf32>
    %cst_31 = arith.constant dense<0.000000e+00> : vector<2x128xf32>
    %53 = tpu.matmul %51, %52, %cst_31 {dimension_numbers = #tpu.dot_dimension_numbers<[1], [0], [0], [1], [0, 0, 1, 1], [], []>} : vector<2x128xf32>, vector<128x128xf32>, vector<2x128xf32> -> vector<2x128xf32>
    %c0_32 = arith.constant 0 : index
    %c0_33 = arith.constant 0 : index
    %54 = vector.load %arg12[%c0_32, %c0_33] : memref<1x128xf32, #tpu.memory_space<vmem>>, vector<1x128xf32>
    %55 = vector.broadcast %54 : vector<1x128xf32> to vector<2x128xf32>
    %56 = arith.addf %53, %55 : vector<2x128xf32>
    %c0_34 = arith.constant 0 : index
    %c0_35 = arith.constant 0 : index
    %57 = vector.load %arg13[%c0_34, %c0_35] : memref<2x128xf32, #tpu.memory_space<vmem>>, vector<2x128xf32>
    tpu.vector_store %arg13[%c0_34, %c0_35], %56 {strides = array<i32>} : memref<2x128xf32, #tpu.memory_space<vmem>>, vector<2x128xf32>,
    return
  }
}

</mosaic_0001>

<llo_original>
// kernel: decent2fine_forward.1
$region0: #{decent2fine_forward.1}
  #allocation0 [shape = 'u32[]', space=smem, size = 0x4, offset = 0x4, fixed_abs, tag = 'smem constant byte address 0x4 - core index']
  #allocation1 [shape = 'u32[144,128]{1,0:T(1,128)}', space=vmem, size = 0x12000, scoped, tag = 'internal scratch']
  %s0 = inlined_call_operand.vmem [shape: s32[512,1], index: 0, kind: input, shape index: {}]
  %s1 = inlined_call_operand.vmem [shape: f32[512,1], index: 1, kind: input, shape index: {}]
  %s2 = inlined_call_operand.vmem [shape: f32[512,32], index: 2, kind: input, shape index: {}]
  %s3 = inlined_call_operand.vmem [shape: f32[512,32], index: 3, kind: input, shape index: {}]
  %s4 = inlined_call_operand.vmem [shape: f32[512,32], index: 4, kind: input, shape index: {}]
  %s5 = inlined_call_operand.vmem [shape: f32[8,32], index: 5, kind: input, shape index: {}]
  %s6 = inlined_call_operand.vmem [shape: f32[1,32], index: 6, kind: input, shape index: {}]
  %s7 = inlined_call_operand.vmem [shape: f32[32,32], index: 7, kind: input, shape index: {}]
  %s8 = inlined_call_operand.vmem [shape: f32[1,32], index: 8, kind: input, shape index: {}]
  %s9 = inlined_call_operand.vmem [shape: f32[32,128], index: 9, kind: input, shape index: {}]
  %s10 = inlined_call_operand.vmem [shape: f32[1,128], index: 10, kind: input, shape index: {}]
  %s11 = inlined_call_operand.vmem [shape: f32[128,128], index: 11, kind: input, shape index: {}]
  %s12 = inlined_call_operand.vmem [shape: f32[1,128], index: 12, kind: input, shape index: {}]
  %s13 = inlined_call_operand.vmem [shape: f32[2,128], index: 13, kind: output, shape index: {}]
  %s14 = sld [smem:[#allocation0]]
  $region62: #{decent2fine_forward.1} parent=0
    _
  %s16 = ssub.s32 1, %s14
  %s17 = scalar_select 0, %s16, %s14
  // Predicated region
  $region2: #{decent2fine_forward.1} parent=0 // pred_check
    _
  $region3: #{decent2fine_forward.1} parent=0 // pred_check_branch
    %19 = sbr.rel (0) target = $region5
  $region4: #{decent2fine_forward.1} parent=0 // pred_region
    _
  $region5: #{decent2fine_forward.1} parent=0 // pred_fallthru
    _
  // Predicated region
  $region6: #{decent2fine_forward.1} parent=0 // pred_check
    _
  $region7: #{decent2fine_forward.1} parent=0 // pred_check_branch
    %21 = sbr.rel (0) target = $region9
  $region8: #{decent2fine_forward.1} parent=0 // pred_region
    _
  $region9: #{decent2fine_forward.1} parent=0 // pred_fallthru
    _
  // Predicated region
  $region10: #{decent2fine_forward.1} parent=0 // pred_check
    _
  $region11: #{decent2fine_forward.1} parent=0 // pred_check_branch
    %23 = sbr.rel (0) target = $region13
  $region12: #{decent2fine_forward.1} parent=0 // pred_region
    _
  $region13: #{decent2fine_forward.1} parent=0 // pred_fallthru
    _
  // Predicated region
  $region14: #{decent2fine_forward.1} parent=0 // pred_check
    _
  $region15: #{decent2fine_forward.1} parent=0 // pred_check_branch
    %25 = sbr.rel (0) target = $region17
  $region16: #{decent2fine_forward.1} parent=0 // pred_region
    _
  $region17: #{decent2fine_forward.1} parent=0 // pred_fallthru
    _
  // Predicated region
  $region18: #{decent2fine_forward.1} parent=0 // pred_check
    _
  $region19: #{decent2fine_forward.1} parent=0 // pred_check_branch
    %27 = sbr.rel (0) target = $region21
  $region20: #{decent2fine_forward.1} parent=0 // pred_region
    _
  $region21: #{decent2fine_forward.1} parent=0 // pred_fallthru
    _
  // Predicated region
  $region22: #{decent2fine_forward.1} parent=0 // pred_check
    _
  $region23: #{decent2fine_forward.1} parent=0 // pred_check_branch
    %29 = sbr.rel (0) target = $region25
  $region24: #{decent2fine_forward.1} parent=0 // pred_region
    _
  $region25: #{decent2fine_forward.1} parent=0 // pred_fallthru
    _
  // Predicated region
  $region26: #{decent2fine_forward.1} parent=0 // pred_check
    _
  $region27: #{decent2fine_forward.1} parent=0 // pred_check_branch
    %31 = sbr.rel (0) target = $region29
  $region28: #{decent2fine_forward.1} parent=0 // pred_region
    _
  $region29: #{decent2fine_forward.1} parent=0 // pred_fallthru
    _
  // Predicated region
  $region30: #{decent2fine_forward.1} parent=0 // pred_check
    _
  $region31: #{decent2fine_forward.1} parent=0 // pred_check_branch
    %33 = sbr.rel (0) target = $region33
  $region32: #{decent2fine_forward.1} parent=0 // pred_region
    _
  $region33: #{decent2fine_forward.1} parent=0 // pred_fallthru
    _
  // Predicated region
  $region34: #{decent2fine_forward.1} parent=0 // pred_check
    _
  $region35: #{decent2fine_forward.1} parent=0 // pred_check_branch
    %35 = sbr.rel (0) target = $region37
  $region36: #{decent2fine_forward.1} parent=0 // pred_region
    _
  $region37: #{decent2fine_forward.1} parent=0 // pred_fallthru
    _
  // Predicated region
  $region38: #{decent2fine_forward.1} parent=0 // pred_check
    _
  $region39: #{decent2fine_forward.1} parent=0 // pred_check_branch
    %37 = sbr.rel (0) target = $region41
  $region40: #{decent2fine_forward.1} parent=0 // pred_region
    _
  $region41: #{decent2fine_forward.1} parent=0 // pred_fallthru
    _
  // Predicated region
  $region42: #{decent2fine_forward.1} parent=0 // pred_check
    _
  $region43: #{decent2fine_forward.1} parent=0 // pred_check_branch
    %39 = sbr.rel (0) target = $region45
  $region44: #{decent2fine_forward.1} parent=0 // pred_region
    _
  $region45: #{decent2fine_forward.1} parent=0 // pred_fallthru
    _
  // Predicated region
  $region46: #{decent2fine_forward.1} parent=0 // pred_check
    _
  $region47: #{decent2fine_forward.1} parent=0 // pred_check_branch
    %41 = sbr.rel (0) target = $region49
  $region48: #{decent2fine_forward.1} parent=0 // pred_region
    _
  $region49: #{decent2fine_forward.1} parent=0 // pred_fallthru
    _
  // Predicated region
  $region50: #{decent2fine_forward.1} parent=0 // pred_check
    _
  $region51: #{decent2fine_forward.1} parent=0 // pred_check_branch
    %43 = sbr.rel (0) target = $region53
  $region52: #{decent2fine_forward.1} parent=0 // pred_region
    _
  $region53: #{decent2fine_forward.1} parent=0 // pred_fallthru
    _
  %v44 = vlaneseq
  %v45 = vand.u32 %v44, 127
  %v46 = vld [vmem:[%s0] sm:$0xff]
  %v47 = vld [vmem:[%s0 + $0x8] sm:$0xff]
  %v48 = vld [vmem:[%s0 + $0x10] sm:$0xff]
  %v49 = vld [vmem:[%s0 + $0x18] sm:$0xff]
  %v50 = vld [vmem:[%s0 + $0x20] sm:$0xff]
  %v51 = vld [vmem:[%s0 + $0x28] sm:$0xff]
  %v52 = vld [vmem:[%s0 + $0x30] sm:$0xff]
  %v53 = vld [vmem:[%s0 + $0x38] sm:$0xff]
  %v54 = vld [vmem:[%s0 + $0x40] sm:$0xff]
  %v55 = vld [vmem:[%s0 + $0x48] sm:$0xff]
  %v56 = vld [vmem:[%s0 + $0x50] sm:$0xff]
  %v57 = vld [vmem:[%s0 + $0x58] sm:$0xff]
  %v58 = vld [vmem:[%s0 + $0x60] sm:$0xff]
  %v59 = vld [vmem:[%s0 + $0x68] sm:$0xff]
  %v60 = vld [vmem:[%s0 + $0x70] sm:$0xff]
  %v61 = vld [vmem:[%s0 + $0x78] sm:$0xff]
  %v62 = vld [vmem:[%s0 + $0x80] sm:$0xff]
  %v63 = vld [vmem:[%s0 + $0x88] sm:$0xff]
  %v64 = vld [vmem:[%s0 + $0x90] sm:$0xff]
  %v65 = vld [vmem:[%s0 + $0x98] sm:$0xff]
  %v66 = vld [vmem:[%s0 + $0xa0] sm:$0xff]
  %v67 = vld [vmem:[%s0 + $0xa8] sm:$0xff]
  %v68 = vld [vmem:[%s0 + $0xb0] sm:$0xff]
  %v69 = vld [vmem:[%s0 + $0xb8] sm:$0xff]
  %v70 = vld [vmem:[%s0 + $0xc0] sm:$0xff]
  %v71 = vld [vmem:[%s0 + $0xc8] sm:$0xff]
  %v72 = vld [vmem:[%s0 + $0xd0] sm:$0xff]
  %v73 = vld [vmem:[%s0 + $0xd8] sm:$0xff]
  %v74 = vld [vmem:[%s0 + $0xe0] sm:$0xff]
  %v75 = vld [vmem:[%s0 + $0xe8] sm:$0xff]
  %v76 = vld [vmem:[%s0 + $0xf0] sm:$0xff]
  %v77 = vld [vmem:[%s0 + $0xf8] sm:$0xff]
  %v78 = vld [vmem:[%s0 + $0x100] sm:$0xff]
  %v79 = vld [vmem:[%s0 + $0x108] sm:$0xff]
  %v80 = vld [vmem:[%s0 + $0x110] sm:$0xff]
  %v81 = vld [vmem:[%s0 + $0x118] sm:$0xff]
  %v82 = vld [vmem:[%s0 + $0x120] sm:$0xff]
  %v83 = vld [vmem:[%s0 + $0x128] sm:$0xff]
  %v84 = vld [vmem:[%s0 + $0x130] sm:$0xff]
  %v85 = vld [vmem:[%s0 + $0x138] sm:$0xff]
  %v86 = vld [vmem:[%s0 + $0x140] sm:$0xff]
  %v87 = vld [vmem:[%s0 + $0x148] sm:$0xff]
  %v88 = vld [vmem:[%s0 + $0x150] sm:$0xff]
  %v89 = vld [vmem:[%s0 + $0x158] sm:$0xff]
  %v90 = vld [vmem:[%s0 + $0x160] sm:$0xff]
  %v91 = vld [vmem:[%s0 + $0x168] sm:$0xff]
  %v92 = vld [vmem:[%s0 + $0x170] sm:$0xff]
  %v93 = vld [vmem:[%s0 + $0x178] sm:$0xff]
  %v94 = vld [vmem:[%s0 + $0x180] sm:$0xff]
  %v95 = vld [vmem:[%s0 + $0x188] sm:$0xff]
  %v96 = vld [vmem:[%s0 + $0x190] sm:$0xff]
  %v97 = vld [vmem:[%s0 + $0x198] sm:$0xff]
  %v98 = vld [vmem:[%s0 + $0x1a0] sm:$0xff]
  %v99 = vld [vmem:[%s0 + $0x1a8] sm:$0xff]
  %v100 = vld [vmem:[%s0 + $0x1b0] sm:$0xff]
  %v101 = vld [vmem:[%s0 + $0x1b8] sm:$0xff]
  %v102 = vld [vmem:[%s0 + $0x1c0] sm:$0xff]
  %v103 = vld [vmem:[%s0 + $0x1c8] sm:$0xff]
  %v104 = vld [vmem:[%s0 + $0x1d0] sm:$0xff]
  %v105 = vld [vmem:[%s0 + $0x1d8] sm:$0xff]
  %v106 = vld [vmem:[%s0 + $0x1e0] sm:$0xff]
  %v107 = vld [vmem:[%s0 + $0x1e8] sm:$0xff]
  %v108 = vld [vmem:[%s0 + $0x1f0] sm:$0xff]
  %v109 = vld [vmem:[%s0 + $0x1f8] sm:$0xff]
  %110 = vset.pattern.permute.xlu0 0
  %111 = vperm.xlu0 %110, %v46
  %v112 = vpop.permute.xlu0 %111
  %113 = vset.pattern.permute.xlu0 0
  %114 = vperm.xlu0 %113, %v47
  %v115 = vpop.permute.xlu0 %114
  %116 = vset.pattern.permute.xlu0 0
  %117 = vperm.xlu0 %116, %v48
  %v118 = vpop.permute.xlu0 %117
  %119 = vset.pattern.permute.xlu0 0
  %120 = vperm.xlu0 %119, %v49
  %v121 = vpop.permute.xlu0 %120
  %122 = vset.pattern.permute.xlu0 0
  %123 = vperm.xlu0 %122, %v50
  %v124 = vpop.permute.xlu0 %123
  %125 = vset.pattern.permute.xlu0 0
  %126 = vperm.xlu0 %125, %v51
  %v127 = vpop.permute.xlu0 %126
  %128 = vset.pattern.permute.xlu0 0
  %129 = vperm.xlu0 %128, %v52
  %v130 = vpop.permute.xlu0 %129
  %131 = vset.pattern.permute.xlu0 0
  %132 = vperm.xlu0 %131, %v53
  %v133 = vpop.permute.xlu0 %132
  %134 = vset.pattern.permute.xlu0 0
  %135 = vperm.xlu0 %134, %v54
  %v136 = vpop.permute.xlu0 %135
  %137 = vset.pattern.permute.xlu0 0
  %138 = vperm.xlu0 %137, %v55
  %v139 = vpop.permute.xlu0 %138
  %140 = vset.pattern.permute.xlu0 0
  %141 = vperm.xlu0 %140, %v56
  %v142 = vpop.permute.xlu0 %141
  %143 = vset.pattern.permute.xlu0 0
  %144 = vperm.xlu0 %143, %v57
  %v145 = vpop.permute.xlu0 %144
  %146 = vset.pattern.permute.xlu0 0
  %147 = vperm.xlu0 %146, %v58
  %v148 = vpop.permute.xlu0 %147
  %149 = vset.pattern.permute.xlu0 0
  %150 = vperm.xlu0 %149, %v59
  %v151 = vpop.permute.xlu0 %150
  %152 = vset.pattern.permute.xlu0 0
  %153 = vperm.xlu0 %152, %v60
  %v154 = vpop.permute.xlu0 %153
  %155 = vset.pattern.permute.xlu0 0
  %156 = vperm.xlu0 %155, %v61
  %v157 = vpop.permute.xlu0 %156
  %158 = vset.pattern.permute.xlu0 0
  %159 = vperm.xlu0 %158, %v62
  %v160 = vpop.permute.xlu0 %159
  %161 = vset.pattern.permute.xlu0 0
  %162 = vperm.xlu0 %161, %v63
  %v163 = vpop.permute.xlu0 %162
  %164 = vset.pattern.permute.xlu0 0
  %165 = vperm.xlu0 %164, %v64
  %v166 = vpop.permute.xlu0 %165
  %167 = vset.pattern.permute.xlu0 0
  %168 = vperm.xlu0 %167, %v65
  %v169 = vpop.permute.xlu0 %168
  %170 = vset.pattern.permute.xlu0 0
  %171 = vperm.xlu0 %170, %v66
  %v172 = vpop.permute.xlu0 %171
  %173 = vset.pattern.permute.xlu0 0
  %174 = vperm.xlu0 %173, %v67
  %v175 = vpop.permute.xlu0 %174
  %176 = vset.pattern.permute.xlu0 0
  %177 = vperm.xlu0 %176, %v68
  %v178 = vpop.permute.xlu0 %177
  %179 = vset.pattern.permute.xlu0 0
  %180 = vperm.xlu0 %179, %v69
  %v181 = vpop.permute.xlu0 %180
  %182 = vset.pattern.permute.xlu0 0
  %183 = vperm.xlu0 %182, %v70
  %v184 = vpop.permute.xlu0 %183
  %185 = vset.pattern.permute.xlu0 0
  %186 = vperm.xlu0 %185, %v71
  %v187 = vpop.permute.xlu0 %186
  %188 = vset.pattern.permute.xlu0 0
  %189 = vperm.xlu0 %188, %v72
  %v190 = vpop.permute.xlu0 %189
  %191 = vset.pattern.permute.xlu0 0
  %192 = vperm.xlu0 %191, %v73
  %v193 = vpop.permute.xlu0 %192
  %194 = vset.pattern.permute.xlu0 0
  %195 = vperm.xlu0 %194, %v74
  %v196 = vpop.permute.xlu0 %195
  %197 = vset.pattern.permute.xlu0 0
  %198 = vperm.xlu0 %197, %v75
  %v199 = vpop.permute.xlu0 %198
  %200 = vset.pattern.permute.xlu0 0
  %201 = vperm.xlu0 %200, %v76
  %v202 = vpop.permute.xlu0 %201
  %203 = vset.pattern.permute.xlu0 0
  %204 = vperm.xlu0 %203, %v77
  %v205 = vpop.permute.xlu0 %204
  %206 = vset.pattern.permute.xlu0 0
  %207 = vperm.xlu0 %206, %v78
  %v208 = vpop.permute.xlu0 %207
  %209 = vset.pattern.permute.xlu0 0
  %210 = vperm.xlu0 %209, %v79
  %v211 = vpop.permute.xlu0 %210
  %212 = vset.pattern.permute.xlu0 0
  %213 = vperm.xlu0 %212, %v80
  %v214 = vpop.permute.xlu0 %213
  %215 = vset.pattern.permute.xlu0 0
  %216 = vperm.xlu0 %215, %v81
  %v217 = vpop.permute.xlu0 %216
  %218 = vset.pattern.permute.xlu0 0
  %219 = vperm.xlu0 %218, %v82
  %v220 = vpop.permute.xlu0 %219
  %221 = vset.pattern.permute.xlu0 0
  %222 = vperm.xlu0 %221, %v83
  %v223 = vpop.permute.xlu0 %222
  %224 = vset.pattern.permute.xlu0 0
  %225 = vperm.xlu0 %224, %v84
  %v226 = vpop.permute.xlu0 %225
  %227 = vset.pattern.permute.xlu0 0
  %228 = vperm.xlu0 %227, %v85
  %v229 = vpop.permute.xlu0 %228
  %230 = vset.pattern.permute.xlu0 0
  %231 = vperm.xlu0 %230, %v86
  %v232 = vpop.permute.xlu0 %231
  %233 = vset.pattern.permute.xlu0 0
  %234 = vperm.xlu0 %233, %v87
  %v235 = vpop.permute.xlu0 %234
  %236 = vset.pattern.permute.xlu0 0
  %237 = vperm.xlu0 %236, %v88
  %v238 = vpop.permute.xlu0 %237
  %239 = vset.pattern.permute.xlu0 0
  %240 = vperm.xlu0 %239, %v89
  %v241 = vpop.permute.xlu0 %240
  %242 = vset.pattern.permute.xlu0 0
  %243 = vperm.xlu0 %242, %v90
  %v244 = vpop.permute.xlu0 %243
  %245 = vset.pattern.permute.xlu0 0
  %246 = vperm.xlu0 %245, %v91
  %v247 = vpop.permute.xlu0 %246
  %248 = vset.pattern.permute.xlu0 0
  %249 = vperm.xlu0 %248, %v92
  %v250 = vpop.permute.xlu0 %249
  %251 = vset.pattern.permute.xlu0 0
  %252 = vperm.xlu0 %251, %v93
  %v253 = vpop.permute.xlu0 %252
  %254 = vset.pattern.permute.xlu0 0
  %255 = vperm.xlu0 %254, %v94
  %v256 = vpop.permute.xlu0 %255
  %257 = vset.pattern.permute.xlu0 0
  %258 = vperm.xlu0 %257, %v95
  %v259 = vpop.permute.xlu0 %258
  %260 = vset.pattern.permute.xlu0 0
  %261 = vperm.xlu0 %260, %v96
  %v262 = vpop.permute.xlu0 %261
  %263 = vset.pattern.permute.xlu0 0
  %264 = vperm.xlu0 %263, %v97
  %v265 = vpop.permute.xlu0 %264
  %266 = vset.pattern.permute.xlu0 0
  %267 = vperm.xlu0 %266, %v98
  %v268 = vpop.permute.xlu0 %267
  %269 = vset.pattern.permute.xlu0 0
  %270 = vperm.xlu0 %269, %v99
  %v271 = vpop.permute.xlu0 %270
  %272 = vset.pattern.permute.xlu0 0
  %273 = vperm.xlu0 %272, %v100
  %v274 = vpop.permute.xlu0 %273
  %275 = vset.pattern.permute.xlu0 0
  %276 = vperm.xlu0 %275, %v101
  %v277 = vpop.permute.xlu0 %276
  %278 = vset.pattern.permute.xlu0 0
  %279 = vperm.xlu0 %278, %v102
  %v280 = vpop.permute.xlu0 %279
  %281 = vset.pattern.permute.xlu0 0
  %282 = vperm.xlu0 %281, %v103
  %v283 = vpop.permute.xlu0 %282
  %284 = vset.pattern.permute.xlu0 0
  %285 = vperm.xlu0 %284, %v104
  %v286 = vpop.permute.xlu0 %285
  %287 = vset.pattern.permute.xlu0 0
  %288 = vperm.xlu0 %287, %v105
  %v289 = vpop.permute.xlu0 %288
  %290 = vset.pattern.permute.xlu0 0
  %291 = vperm.xlu0 %290, %v106
  %v292 = vpop.permute.xlu0 %291
  %293 = vset.pattern.permute.xlu0 0
  %294 = vperm.xlu0 %293, %v107
  %v295 = vpop.permute.xlu0 %294
  %296 = vset.pattern.permute.xlu0 0
  %297 = vperm.xlu0 %296, %v108
  %v298 = vpop.permute.xlu0 %297
  %299 = vset.pattern.permute.xlu0 0
  %300 = vperm.xlu0 %299, %v109
  %v301 = vpop.permute.xlu0 %300
  %vm302 = vcmp.eq.s32.totalorder %v45, %v112
  %vm303 = vcmp.eq.s32.totalorder %v45, %v115
  %vm304 = vcmp.eq.s32.totalorder %v45, %v118
  %vm305 = vcmp.eq.s32.totalorder %v45, %v121
  %vm306 = vcmp.eq.s32.totalorder %v45, %v124
  %vm307 = vcmp.eq.s32.totalorder %v45, %v127
  %vm308 = vcmp.eq.s32.totalorder %v45, %v130
  %vm309 = vcmp.eq.s32.totalorder %v45, %v133
  %vm310 = vcmp.eq.s32.totalorder %v45, %v136
  %vm311 = vcmp.eq.s32.totalorder %v45, %v139
  %vm312 = vcmp.eq.s32.totalorder %v45, %v142
  %vm313 = vcmp.eq.s32.totalorder %v45, %v145
  %vm314 = vcmp.eq.s32.totalorder %v45, %v148
  %vm315 = vcmp.eq.s32.totalorder %v45, %v151
  %vm316 = vcmp.eq.s32.totalorder %v45, %v154
  %vm317 = vcmp.eq.s32.totalorder %v45, %v157
  %vm318 = vcmp.eq.s32.totalorder %v45, %v160
  %vm319 = vcmp.eq.s32.totalorder %v45, %v163
  %vm320 = vcmp.eq.s32.totalorder %v45, %v166
  %vm321 = vcmp.eq.s32.totalorder %v45, %v169
  %vm322 = vcmp.eq.s32.totalorder %v45, %v172
  %vm323 = vcmp.eq.s32.totalorder %v45, %v175
  %vm324 = vcmp.eq.s32.totalorder %v45, %v178
  %vm325 = vcmp.eq.s32.totalorder %v45, %v181
  %vm326 = vcmp.eq.s32.totalorder %v45, %v184
  %vm327 = vcmp.eq.s32.totalorder %v45, %v187
  %vm328 = vcmp.eq.s32.totalorder %v45, %v190
  %vm329 = vcmp.eq.s32.totalorder %v45, %v193
  %vm330 = vcmp.eq.s32.totalorder %v45, %v196
  %vm331 = vcmp.eq.s32.totalorder %v45, %v199
  %vm332 = vcmp.eq.s32.totalorder %v45, %v202
  %vm333 = vcmp.eq.s32.totalorder %v45, %v205
  %vm334 = vcmp.eq.s32.totalorder %v45, %v208
  %vm335 = vcmp.eq.s32.totalorder %v45, %v211
  %vm336 = vcmp.eq.s32.totalorder %v45, %v214
  %vm337 = vcmp.eq.s32.totalorder %v45, %v217
  %vm338 = vcmp.eq.s32.totalorder %v45, %v220
  %vm339 = vcmp.eq.s32.totalorder %v45, %v223
  %vm340 = vcmp.eq.s32.totalorder %v45, %v226
  %vm341 = vcmp.eq.s32.totalorder %v45, %v229
  %vm342 = vcmp.eq.s32.totalorder %v45, %v232
  %vm343 = vcmp.eq.s32.totalorder %v45, %v235
  %vm344 = vcmp.eq.s32.totalorder %v45, %v238
  %vm345 = vcmp.eq.s32.totalorder %v45, %v241
  %vm346 = vcmp.eq.s32.totalorder %v45, %v244
  %vm347 = vcmp.eq.s32.totalorder %v45, %v247
  %vm348 = vcmp.eq.s32.totalorder %v45, %v250
  %vm349 = vcmp.eq.s32.totalorder %v45, %v253
  %vm350 = vcmp.eq.s32.totalorder %v45, %v256
  %vm351 = vcmp.eq.s32.totalorder %v45, %v259
  %vm352 = vcmp.eq.s32.totalorder %v45, %v262
  %vm353 = vcmp.eq.s32.totalorder %v45, %v265
  %vm354 = vcmp.eq.s32.totalorder %v45, %v268
  %vm355 = vcmp.eq.s32.totalorder %v45, %v271
  %vm356 = vcmp.eq.s32.totalorder %v45, %v274
  %vm357 = vcmp.eq.s32.totalorder %v45, %v277
  %vm358 = vcmp.eq.s32.totalorder %v45, %v280
  %vm359 = vcmp.eq.s32.totalorder %v45, %v283
  %vm360 = vcmp.eq.s32.totalorder %v45, %v286
  %vm361 = vcmp.eq.s32.totalorder %v45, %v289
  %vm362 = vcmp.eq.s32.totalorder %v45, %v292
  %vm363 = vcmp.eq.s32.totalorder %v45, %v295
  %vm364 = vcmp.eq.s32.totalorder %v45, %v298
  %vm365 = vcmp.eq.s32.totalorder %v45, %v301
  %v366 = vsel %vm302, 1, 0
  %v367 = vsel %vm303, 1, 0
  %v368 = vsel %vm304, 1, 0
  %v369 = vsel %vm305, 1, 0
  %v370 = vsel %vm306, 1, 0
  %v371 = vsel %vm307, 1, 0
  %v372 = vsel %vm308, 1, 0
  %v373 = vsel %vm309, 1, 0
  %v374 = vsel %vm310, 1, 0
  %v375 = vsel %vm311, 1, 0
  %v376 = vsel %vm312, 1, 0
  %v377 = vsel %vm313, 1, 0
  %v378 = vsel %vm314, 1, 0
  %v379 = vsel %vm315, 1, 0
  %v380 = vsel %vm316, 1, 0
  %v381 = vsel %vm317, 1, 0
  %v382 = vsel %vm318, 1, 0
  %v383 = vsel %vm319, 1, 0
  %v384 = vsel %vm320, 1, 0
  %v385 = vsel %vm321, 1, 0
  %v386 = vsel %vm322, 1, 0
  %v387 = vsel %vm323, 1, 0
  %v388 = vsel %vm324, 1, 0
  %v389 = vsel %vm325, 1, 0
  %v390 = vsel %vm326, 1, 0
  %v391 = vsel %vm327, 1, 0
  %v392 = vsel %vm328, 1, 0
  %v393 = vsel %vm329, 1, 0
  %v394 = vsel %vm330, 1, 0
  %v395 = vsel %vm331, 1, 0
  %v396 = vsel %vm332, 1, 0
  %v397 = vsel %vm333, 1, 0
  %v398 = vsel %vm334, 1, 0
  %v399 = vsel %vm335, 1, 0
  %v400 = vsel %vm336, 1, 0
  %v401 = vsel %vm337, 1, 0
  %v402 = vsel %vm338, 1, 0
  %v403 = vsel %vm339, 1, 0
  %v404 = vsel %vm340, 1, 0
  %v405 = vsel %vm341, 1, 0
  %v406 = vsel %vm342, 1, 0
  %v407 = vsel %vm343, 1, 0
  %v408 = vsel %vm344, 1, 0
  %v409 = vsel %vm345, 1, 0
  %v410 = vsel %vm346, 1, 0
  %v411 = vsel %vm347, 1, 0
  %v412 = vsel %vm348, 1, 0
  %v413 = vsel %vm349, 1, 0
  %v414 = vsel %vm350, 1, 0
  %v415 = vsel %vm351, 1, 0
  %v416 = vsel %vm352, 1, 0
  %v417 = vsel %vm353, 1, 0
  %v418 = vsel %vm354, 1, 0
  %v419 = vsel %vm355, 1, 0
  %v420 = vsel %vm356, 1, 0
  %v421 = vsel %vm357, 1, 0
  %v422 = vsel %vm358, 1, 0
  %v423 = vsel %vm359, 1, 0
  %v424 = vsel %vm360, 1, 0
  %v425 = vsel %vm361, 1, 0
  %v426 = vsel %vm362, 1, 0
  %v427 = vsel %vm363, 1, 0
  %v428 = vsel %vm364, 1, 0
  %v429 = vsel %vm365, 1, 0
  %v430 = vcvt.s32.f32 %v366
  %v431 = vcvt.s32.f32 %v367
  %v432 = vcvt.s32.f32 %v368
  %v433 = vcvt.s32.f32 %v369
  %v434 = vcvt.s32.f32 %v370
  %v435 = vcvt.s32.f32 %v371
  %v436 = vcvt.s32.f32 %v372
  %v437 = vcvt.s32.f32 %v373
  %v438 = vcvt.s32.f32 %v374
  %v439 = vcvt.s32.f32 %v375
  %v440 = vcvt.s32.f32 %v376
  %v441 = vcvt.s32.f32 %v377
  %v442 = vcvt.s32.f32 %v378
  %v443 = vcvt.s32.f32 %v379
  %v444 = vcvt.s32.f32 %v380
  %v445 = vcvt.s32.f32 %v381
  %v446 = vcvt.s32.f32 %v382
  %v447 = vcvt.s32.f32 %v383
  %v448 = vcvt.s32.f32 %v384
  %v449 = vcvt.s32.f32 %v385
  %v450 = vcvt.s32.f32 %v386
  %v451 = vcvt.s32.f32 %v387
  %v452 = vcvt.s32.f32 %v388
  %v453 = vcvt.s32.f32 %v389
  %v454 = vcvt.s32.f32 %v390
  %v455 = vcvt.s32.f32 %v391
  %v456 = vcvt.s32.f32 %v392
  %v457 = vcvt.s32.f32 %v393
  %v458 = vcvt.s32.f32 %v394
  %v459 = vcvt.s32.f32 %v395
  %v460 = vcvt.s32.f32 %v396
  %v461 = vcvt.s32.f32 %v397
  %v462 = vcvt.s32.f32 %v398
  %v463 = vcvt.s32.f32 %v399
  %v464 = vcvt.s32.f32 %v400
  %v465 = vcvt.s32.f32 %v401
  %v466 = vcvt.s32.f32 %v402
  %v467 = vcvt.s32.f32 %v403
  %v468 = vcvt.s32.f32 %v404
  %v469 = vcvt.s32.f32 %v405
  %v470 = vcvt.s32.f32 %v406
  %v471 = vcvt.s32.f32 %v407
  %v472 = vcvt.s32.f32 %v408
  %v473 = vcvt.s32.f32 %v409
  %v474 = vcvt.s32.f32 %v410
  %v475 = vcvt.s32.f32 %v411
  %v476 = vcvt.s32.f32 %v412
  %v477 = vcvt.s32.f32 %v413
  %v478 = vcvt.s32.f32 %v414
  %v479 = vcvt.s32.f32 %v415
  %v480 = vcvt.s32.f32 %v416
  %v481 = vcvt.s32.f32 %v417
  %v482 = vcvt.s32.f32 %v418
  %v483 = vcvt.s32.f32 %v419
  %v484 = vcvt.s32.f32 %v420
  %v485 = vcvt.s32.f32 %v421
  %v486 = vcvt.s32.f32 %v422
  %v487 = vcvt.s32.f32 %v423
  %v488 = vcvt.s32.f32 %v424
  %v489 = vcvt.s32.f32 %v425
  %v490 = vcvt.s32.f32 %v426
  %v491 = vcvt.s32.f32 %v427
  %v492 = vcvt.s32.f32 %v428
  %v493 = vcvt.s32.f32 %v429
  %v494 = vld [vmem:[%s1] sm:$0xff]
  %v495 = vld [vmem:[%s1 + $0x8] sm:$0xff]
  %v496 = vld [vmem:[%s1 + $0x10] sm:$0xff]
  %v497 = vld [vmem:[%s1 + $0x18] sm:$0xff]
  %v498 = vld [vmem:[%s1 + $0x20] sm:$0xff]
  %v499 = vld [vmem:[%s1 + $0x28] sm:$0xff]
  %v500 = vld [vmem:[%s1 + $0x30] sm:$0xff]
  %v501 = vld [vmem:[%s1 + $0x38] sm:$0xff]
  %v502 = vld [vmem:[%s1 + $0x40] sm:$0xff]
  %v503 = vld [vmem:[%s1 + $0x48] sm:$0xff]
  %v504 = vld [vmem:[%s1 + $0x50] sm:$0xff]
  %v505 = vld [vmem:[%s1 + $0x58] sm:$0xff]
  %v506 = vld [vmem:[%s1 + $0x60] sm:$0xff]
  %v507 = vld [vmem:[%s1 + $0x68] sm:$0xff]
  %v508 = vld [vmem:[%s1 + $0x70] sm:$0xff]
  %v509 = vld [vmem:[%s1 + $0x78] sm:$0xff]
  %v510 = vld [vmem:[%s1 + $0x80] sm:$0xff]
  %v511 = vld [vmem:[%s1 + $0x88] sm:$0xff]
  %v512 = vld [vmem:[%s1 + $0x90] sm:$0xff]
  %v513 = vld [vmem:[%s1 + $0x98] sm:$0xff]
  %v514 = vld [vmem:[%s1 + $0xa0] sm:$0xff]
  %v515 = vld [vmem:[%s1 + $0xa8] sm:$0xff]
  %v516 = vld [vmem:[%s1 + $0xb0] sm:$0xff]
  %v517 = vld [vmem:[%s1 + $0xb8] sm:$0xff]
  %v518 = vld [vmem:[%s1 + $0xc0] sm:$0xff]
  %v519 = vld [vmem:[%s1 + $0xc8] sm:$0xff]
  %v520 = vld [vmem:[%s1 + $0xd0] sm:$0xff]
  %v521 = vld [vmem:[%s1 + $0xd8] sm:$0xff]
  %v522 = vld [vmem:[%s1 + $0xe0] sm:$0xff]
  %v523 = vld [vmem:[%s1 + $0xe8] sm:$0xff]
  %v524 = vld [vmem:[%s1 + $0xf0] sm:$0xff]
  %v525 = vld [vmem:[%s1 + $0xf8] sm:$0xff]
  %v526 = vld [vmem:[%s1 + $0x100] sm:$0xff]
  %v527 = vld [vmem:[%s1 + $0x108] sm:$0xff]
  %v528 = vld [vmem:[%s1 + $0x110] sm:$0xff]
  %v529 = vld [vmem:[%s1 + $0x118] sm:$0xff]
  %v530 = vld [vmem:[%s1 + $0x120] sm:$0xff]
  %v531 = vld [vmem:[%s1 + $0x128] sm:$0xff]
  %v532 = vld [vmem:[%s1 + $0x130] sm:$0xff]
  %v533 = vld [vmem:[%s1 + $0x138] sm:$0xff]
  %v534 = vld [vmem:[%s1 + $0x140] sm:$0xff]
  %v535 = vld [vmem:[%s1 + $0x148] sm:$0xff]
  %v536 = vld [vmem:[%s1 + $0x150] sm:$0xff]
  %v537 = vld [vmem:[%s1 + $0x158] sm:$0xff]
  %v538 = vld [vmem:[%s1 + $0x160] sm:$0xff]
  %v539 = vld [vmem:[%s1 + $0x168] sm:$0xff]
  %v540 = vld [vmem:[%s1 + $0x170] sm:$0xff]
  %v541 = vld [vmem:[%s1 + $0x178] sm:$0xff]
  %v542 = vld [vmem:[%s1 + $0x180] sm:$0xff]
  %v543 = vld [vmem:[%s1 + $0x188] sm:$0xff]
  %v544 = vld [vmem:[%s1 + $0x190] sm:$0xff]
  %v545 = vld [vmem:[%s1 + $0x198] sm:$0xff]
  %v546 = vld [vmem:[%s1 + $0x1a0] sm:$0xff]
  %v547 = vld [vmem:[%s1 + $0x1a8] sm:$0xff]
  %v548 = vld [vmem:[%s1 + $0x1b0] sm:$0xff]
  %v549 = vld [vmem:[%s1 + $0x1b8] sm:$0xff]
  %v550 = vld [vmem:[%s1 + $0x1c0] sm:$0xff]
  %v551 = vld [vmem:[%s1 + $0x1c8] sm:$0xff]
  %v552 = vld [vmem:[%s1 + $0x1d0] sm:$0xff]
  %v553 = vld [vmem:[%s1 + $0x1d8] sm:$0xff]
  %v554 = vld [vmem:[%s1 + $0x1e0] sm:$0xff]
  %v555 = vld [vmem:[%s1 + $0x1e8] sm:$0xff]
  %v556 = vld [vmem:[%s1 + $0x1f0] sm:$0xff]
  %v557 = vld [vmem:[%s1 + $0x1f8] sm:$0xff]
  %559 = vset.pattern.permute.xlu0 0
  %560 = vperm.xlu0 %559, %v494
  %v561 = vpop.permute.xlu0 %560
  %564 = vset.pattern.permute.xlu0 0
  %565 = vperm.xlu0 %564, %v495
  %v566 = vpop.permute.xlu0 %565
  %569 = vset.pattern.permute.xlu0 0
  %570 = vperm.xlu0 %569, %v496
  %v571 = vpop.permute.xlu0 %570
  %574 = vset.pattern.permute.xlu0 0
  %575 = vperm.xlu0 %574, %v497
  %v576 = vpop.permute.xlu0 %575
  %579 = vset.pattern.permute.xlu0 0
  %580 = vperm.xlu0 %579, %v498
  %v581 = vpop.permute.xlu0 %580
  %584 = vset.pattern.permute.xlu0 0
  %585 = vperm.xlu0 %584, %v499
  %v586 = vpop.permute.xlu0 %585
  %589 = vset.pattern.permute.xlu0 0
  %590 = vperm.xlu0 %589, %v500
  %v591 = vpop.permute.xlu0 %590
  %594 = vset.pattern.permute.xlu0 0
  %595 = vperm.xlu0 %594, %v501
  %v596 = vpop.permute.xlu0 %595
  %599 = vset.pattern.permute.xlu0 0
  %600 = vperm.xlu0 %599, %v502
  %v601 = vpop.permute.xlu0 %600
  %604 = vset.pattern.permute.xlu0 0
  %605 = vperm.xlu0 %604, %v503
  %v606 = vpop.permute.xlu0 %605
  %609 = vset.pattern.permute.xlu0 0
  %610 = vperm.xlu0 %609, %v504
  %v611 = vpop.permute.xlu0 %610
  %614 = vset.pattern.permute.xlu0 0
  %615 = vperm.xlu0 %614, %v505
  %v616 = vpop.permute.xlu0 %615
  %619 = vset.pattern.permute.xlu0 0
  %620 = vperm.xlu0 %619, %v506
  %v621 = vpop.permute.xlu0 %620
  %624 = vset.pattern.permute.xlu0 0
  %625 = vperm.xlu0 %624, %v507
  %v626 = vpop.permute.xlu0 %625
  %629 = vset.pattern.permute.xlu0 0
  %630 = vperm.xlu0 %629, %v508
  %v631 = vpop.permute.xlu0 %630
  %634 = vset.pattern.permute.xlu0 0
  %635 = vperm.xlu0 %634, %v509
  %v636 = vpop.permute.xlu0 %635
  %639 = vset.pattern.permute.xlu0 0
  %640 = vperm.xlu0 %639, %v510
  %v641 = vpop.permute.xlu0 %640
  %644 = vset.pattern.permute.xlu0 0
  %645 = vperm.xlu0 %644, %v511
  %v646 = vpop.permute.xlu0 %645
  %649 = vset.pattern.permute.xlu0 0
  %650 = vperm.xlu0 %649, %v512
  %v651 = vpop.permute.xlu0 %650
  %654 = vset.pattern.permute.xlu0 0
  %655 = vperm.xlu0 %654, %v513
  %v656 = vpop.permute.xlu0 %655
  %659 = vset.pattern.permute.xlu0 0
  %660 = vperm.xlu0 %659, %v514
  %v661 = vpop.permute.xlu0 %660
  %664 = vset.pattern.permute.xlu0 0
  %665 = vperm.xlu0 %664, %v515
  %v666 = vpop.permute.xlu0 %665
  %669 = vset.pattern.permute.xlu0 0
  %670 = vperm.xlu0 %669, %v516
  %v671 = vpop.permute.xlu0 %670
  %674 = vset.pattern.permute.xlu0 0
  %675 = vperm.xlu0 %674, %v517
  %v676 = vpop.permute.xlu0 %675
  %679 = vset.pattern.permute.xlu0 0
  %680 = vperm.xlu0 %679, %v518
  %v681 = vpop.permute.xlu0 %680
  %684 = vset.pattern.permute.xlu0 0
  %685 = vperm.xlu0 %684, %v519
  %v686 = vpop.permute.xlu0 %685
  %689 = vset.pattern.permute.xlu0 0
  %690 = vperm.xlu0 %689, %v520
  %v691 = vpop.permute.xlu0 %690
  %694 = vset.pattern.permute.xlu0 0
  %695 = vperm.xlu0 %694, %v521
  %v696 = vpop.permute.xlu0 %695
  %699 = vset.pattern.permute.xlu0 0
  %700 = vperm.xlu0 %699, %v522
  %v701 = vpop.permute.xlu0 %700
  %704 = vset.pattern.permute.xlu0 0
  %705 = vperm.xlu0 %704, %v523
  %v706 = vpop.permute.xlu0 %705
  %709 = vset.pattern.permute.xlu0 0
  %710 = vperm.xlu0 %709, %v524
  %v711 = vpop.permute.xlu0 %710
  %714 = vset.pattern.permute.xlu0 0
  %715 = vperm.xlu0 %714, %v525
  %v716 = vpop.permute.xlu0 %715
  %719 = vset.pattern.permute.xlu0 0
  %720 = vperm.xlu0 %719, %v526
  %v721 = vpop.permute.xlu0 %720
  %724 = vset.pattern.permute.xlu0 0
  %725 = vperm.xlu0 %724, %v527
  %v726 = vpop.permute.xlu0 %725
  %729 = vset.pattern.permute.xlu0 0
  %730 = vperm.xlu0 %729, %v528
  %v731 = vpop.permute.xlu0 %730
  %734 = vset.pattern.permute.xlu0 0
  %735 = vperm.xlu0 %734, %v529
  %v736 = vpop.permute.xlu0 %735
  %739 = vset.pattern.permute.xlu0 0
  %740 = vperm.xlu0 %739, %v530
  %v741 = vpop.permute.xlu0 %740
  %744 = vset.pattern.permute.xlu0 0
  %745 = vperm.xlu0 %744, %v531
  %v746 = vpop.permute.xlu0 %745
  %749 = vset.pattern.permute.xlu0 0
  %750 = vperm.xlu0 %749, %v532
  %v751 = vpop.permute.xlu0 %750
  %754 = vset.pattern.permute.xlu0 0
  %755 = vperm.xlu0 %754, %v533
  %v756 = vpop.permute.xlu0 %755
  %759 = vset.pattern.permute.xlu0 0
  %760 = vperm.xlu0 %759, %v534
  %v761 = vpop.permute.xlu0 %760
  %764 = vset.pattern.permute.xlu0 0
  %765 = vperm.xlu0 %764, %v535
  %v766 = vpop.permute.xlu0 %765
  %769 = vset.pattern.permute.xlu0 0
  %770 = vperm.xlu0 %769, %v536
  %v771 = vpop.permute.xlu0 %770
  %774 = vset.pattern.permute.xlu0 0
  %775 = vperm.xlu0 %774, %v537
  %v776 = vpop.permute.xlu0 %775
  %779 = vset.pattern.permute.xlu0 0
  %780 = vperm.xlu0 %779, %v538
  %v781 = vpop.permute.xlu0 %780
  %784 = vset.pattern.permute.xlu0 0
  %785 = vperm.xlu0 %784, %v539
  %v786 = vpop.permute.xlu0 %785
  %789 = vset.pattern.permute.xlu0 0
  %790 = vperm.xlu0 %789, %v540
  %v791 = vpop.permute.xlu0 %790
  %794 = vset.pattern.permute.xlu0 0
  %795 = vperm.xlu0 %794, %v541
  %v796 = vpop.permute.xlu0 %795
  %799 = vset.pattern.permute.xlu0 0
  %800 = vperm.xlu0 %799, %v542
  %v801 = vpop.permute.xlu0 %800
  %804 = vset.pattern.permute.xlu0 0
  %805 = vperm.xlu0 %804, %v543
  %v806 = vpop.permute.xlu0 %805
  %809 = vset.pattern.permute.xlu0 0
  %810 = vperm.xlu0 %809, %v544
  %v811 = vpop.permute.xlu0 %810
  %814 = vset.pattern.permute.xlu0 0
  %815 = vperm.xlu0 %814, %v545
  %v816 = vpop.permute.xlu0 %815
  %819 = vset.pattern.permute.xlu0 0
  %820 = vperm.xlu0 %819, %v546
  %v821 = vpop.permute.xlu0 %820
  %824 = vset.pattern.permute.xlu0 0
  %825 = vperm.xlu0 %824, %v547
  %v826 = vpop.permute.xlu0 %825
  %829 = vset.pattern.permute.xlu0 0
  %830 = vperm.xlu0 %829, %v548
  %v831 = vpop.permute.xlu0 %830
  %834 = vset.pattern.permute.xlu0 0
  %835 = vperm.xlu0 %834, %v549
  %v836 = vpop.permute.xlu0 %835
  %839 = vset.pattern.permute.xlu0 0
  %840 = vperm.xlu0 %839, %v550
  %v841 = vpop.permute.xlu0 %840
  %844 = vset.pattern.permute.xlu0 0
  %845 = vperm.xlu0 %844, %v551
  %v846 = vpop.permute.xlu0 %845
  %849 = vset.pattern.permute.xlu0 0
  %850 = vperm.xlu0 %849, %v552
  %v851 = vpop.permute.xlu0 %850
  %854 = vset.pattern.permute.xlu0 0
  %855 = vperm.xlu0 %854, %v553
  %v856 = vpop.permute.xlu0 %855
  %859 = vset.pattern.permute.xlu0 0
  %860 = vperm.xlu0 %859, %v554
  %v861 = vpop.permute.xlu0 %860
  %864 = vset.pattern.permute.xlu0 0
  %865 = vperm.xlu0 %864, %v555
  %v866 = vpop.permute.xlu0 %865
  %869 = vset.pattern.permute.xlu0 0
  %870 = vperm.xlu0 %869, %v556
  %v871 = vpop.permute.xlu0 %870
  %874 = vset.pattern.permute.xlu0 0
  %875 = vperm.xlu0 %874, %v557
  %v876 = vpop.permute.xlu0 %875
  %v878 = vmul.f32 %v430, %v561
  %v879 = vmul.f32 %v431, %v566
  %v880 = vmul.f32 %v432, %v571
  %v881 = vmul.f32 %v433, %v576
  %v882 = vmul.f32 %v434, %v581
  %v883 = vmul.f32 %v435, %v586
  %v884 = vmul.f32 %v436, %v591
  %v885 = vmul.f32 %v437, %v596
  %v886 = vmul.f32 %v438, %v601
  %v887 = vmul.f32 %v439, %v606
  %v888 = vmul.f32 %v440, %v611
  %v889 = vmul.f32 %v441, %v616
  %v890 = vmul.f32 %v442, %v621
  %v891 = vmul.f32 %v443, %v626
  %v892 = vmul.f32 %v444, %v631
  %v893 = vmul.f32 %v445, %v636
  %v894 = vmul.f32 %v446, %v641
  %v895 = vmul.f32 %v447, %v646
  %v896 = vmul.f32 %v448, %v651
  %v897 = vmul.f32 %v449, %v656
  %v898 = vmul.f32 %v450, %v661
  %v899 = vmul.f32 %v451, %v666
  %v900 = vmul.f32 %v452, %v671
  %v901 = vmul.f32 %v453, %v676
  %v902 = vmul.f32 %v454, %v681
  %v903 = vmul.f32 %v455, %v686
  %v904 = vmul.f32 %v456, %v691
  %v905 = vmul.f32 %v457, %v696
  %v906 = vmul.f32 %v458, %v701
  %v907 = vmul.f32 %v459, %v706
  %v908 = vmul.f32 %v460, %v711
  %v909 = vmul.f32 %v461, %v716
  %v910 = vmul.f32 %v462, %v721
  %v911 = vmul.f32 %v463, %v726
  %v912 = vmul.f32 %v464, %v731
  %v913 = vmul.f32 %v465, %v736
  %v914 = vmul.f32 %v466, %v741
  %v915 = vmul.f32 %v467, %v746
  %v916 = vmul.f32 %v468, %v751
  %v917 = vmul.f32 %v469, %v756
  %v918 = vmul.f32 %v470, %v761
  %v919 = vmul.f32 %v471, %v766
  %v920 = vmul.f32 %v472, %v771
  %v921 = vmul.f32 %v473, %v776
  %v922 = vmul.f32 %v474, %v781
  %v923 = vmul.f32 %v475, %v786
  %v924 = vmul.f32 %v476, %v791
  %v925 = vmul.f32 %v477, %v796
  %v926 = vmul.f32 %v478, %v801
  %v927 = vmul.f32 %v479, %v806
  %v928 = vmul.f32 %v480, %v811
  %v929 = vmul.f32 %v481, %v816
  %v930 = vmul.f32 %v482, %v821
  %v931 = vmul.f32 %v483, %v826
  %v932 = vmul.f32 %v484, %v831
  %v933 = vmul.f32 %v485, %v836
  %v934 = vmul.f32 %v486, %v841
  %v935 = vmul.f32 %v487, %v846
  %v936 = vmul.f32 %v488, %v851
  %v937 = vmul.f32 %v489, %v856
  %v938 = vmul.f32 %v490, %v861
  %v939 = vmul.f32 %v491, %v866
  %v940 = vmul.f32 %v492, %v871
  %v941 = vmul.f32 %v493, %v876
  %v942 = vld [vmem:[%s5] sm:$0xff]
  %v943 = vld [vmem:[%s6] sm:$0x1]
  %v945 = vlaneseq
  %v946 = vshrl.u32 %v945, 7
  %v947 = vsub.s32 0, %v946
  %v948 = vrot.slane %v943, %v947
  %vm950 = vcmask 64512
  %v952 = vsel %vm950, %v878, 0
  %v955 = vsel %vm950, %v879, 0
  %v958 = vsel %vm950, %v880, 0
  %v961 = vsel %vm950, %v881, 0
  %v964 = vsel %vm950, %v882, 0
  %v967 = vsel %vm950, %v883, 0
  %v970 = vsel %vm950, %v884, 0
  %v973 = vsel %vm950, %v885, 0
  %v976 = vsel %vm950, %v886, 0
  %v979 = vsel %vm950, %v887, 0
  %v982 = vsel %vm950, %v888, 0
  %v985 = vsel %vm950, %v889, 0
  %v988 = vsel %vm950, %v890, 0
  %v991 = vsel %vm950, %v891, 0
  %v994 = vsel %vm950, %v892, 0
  %v997 = vsel %vm950, %v893, 0
  %v1000 = vsel %vm950, %v894, 0
  %v1003 = vsel %vm950, %v895, 0
  %v1006 = vsel %vm950, %v896, 0
  %v1009 = vsel %vm950, %v897, 0
  %v1012 = vsel %vm950, %v898, 0
  %v1015 = vsel %vm950, %v899, 0
  %v1018 = vsel %vm950, %v900, 0
  %v1021 = vsel %vm950, %v901, 0
  %v1024 = vsel %vm950, %v902, 0
  %v1027 = vsel %vm950, %v903, 0
  %v1030 = vsel %vm950, %v904, 0
  %v1033 = vsel %vm950, %v905, 0
  %v1036 = vsel %vm950, %v906, 0
  %v1039 = vsel %vm950, %v907, 0
  %v1042 = vsel %vm950, %v908, 0
  %v1045 = vsel %vm950, %v909, 0
  %v1048 = vsel %vm950, %v910, 0
  %v1051 = vsel %vm950, %v911, 0
  %v1054 = vsel %vm950, %v912, 0
  %v1057 = vsel %vm950, %v913, 0
  %v1060 = vsel %vm950, %v914, 0
  %v1063 = vsel %vm950, %v915, 0
  %v1066 = vsel %vm950, %v916, 0
  %v1069 = vsel %vm950, %v917, 0
  %v1072 = vsel %vm950, %v918, 0
  %v1075 = vsel %vm950, %v919, 0
  %v1078 = vsel %vm950, %v920, 0
  %v1081 = vsel %vm950, %v921, 0
  %v1084 = vsel %vm950, %v922, 0
  %v1087 = vsel %vm950, %v923, 0
  %v1090 = vsel %vm950, %v924, 0
  %v1093 = vsel %vm950, %v925, 0
  %v1096 = vsel %vm950, %v926, 0
  %v1099 = vsel %vm950, %v927, 0
  %v1102 = vsel %vm950, %v928, 0
  %v1105 = vsel %vm950, %v929, 0
  %v1108 = vsel %vm950, %v930, 0
  %v1111 = vsel %vm950, %v931, 0
  %v1114 = vsel %vm950, %v932, 0
  %v1117 = vsel %vm950, %v933, 0
  %v1120 = vsel %vm950, %v934, 0
  %v1123 = vsel %vm950, %v935, 0
  %v1126 = vsel %vm950, %v936, 0
  %v1129 = vsel %vm950, %v937, 0
  %v1132 = vsel %vm950, %v938, 0
  %v1135 = vsel %vm950, %v939, 0
  %v1138 = vsel %vm950, %v940, 0
  %v1141 = vsel %vm950, %v941, 0
  %1143 = vmatprep.subr.mxu0 0.0
  %1144 = vmatpush1.msra.mxu0 %v942
  %1145 = vmatprep.subr.mxu0 0.0
  %1146 = vmatpush1.msra.mxu0 0.0
  %1147 = vmatprep.subr.mxu0 0.0
  %1148 = vmatpush1.msra.mxu0 0.0
  %1149 = vmatprep.subr.mxu0 0.0
  %1150 = vmatpush1.msra.mxu0 0.0
  %1151 = vmatprep.subr.mxu0 0.0
  %1152 = vmatpush1.msra.mxu0 0.0
  %1153 = vmatprep.subr.mxu0 0.0
  %1154 = vmatpush1.msra.mxu0 0.0
  %1155 = vmatprep.subr.mxu0 0.0
  %1156 = vmatpush1.msra.mxu0 0.0
  %1157 = vmatprep.subr.mxu0 0.0
  %1158 = vmatpush1.msra.mxu0 0.0
  %1159 = vmatprep.subr.mxu0 0.0
  %1160 = vmatpush1.msra.mxu0 0.0
  %1161 = vmatprep.subr.mxu0 0.0
  %1162 = vmatpush1.msra.mxu0 0.0
  %1163 = vmatprep.subr.mxu0 0.0
  %1164 = vmatpush1.msra.mxu0 0.0
  %1165 = vmatprep.subr.mxu0 0.0
  %1166 = vmatpush1.msra.mxu0 0.0
  %1167 = vmatprep.subr.mxu0 0.0
  %1168 = vmatpush1.msra.mxu0 0.0
  %1169 = vmatprep.subr.mxu0 0.0
  %1170 = vmatpush1.msra.mxu0 0.0
  %1171 = vmatprep.subr.mxu0 0.0
  %1172 = vmatpush1.msra.mxu0 0.0
  %1173 = vmatprep.subr.mxu0 0.0
  %1174 = vmatpush1.msra.mxu0 0.0
  %1175 = vmatprep.subr.mxu0 0.0
  %1176 = vmatpush1.msra.mxu0 0.0
  %1177 = vmatprep.subr.mxu0 0.0
  %1178 = vmatpush1.msra.mxu0 0.0
  %1179 = vmatprep.subr.mxu0 0.0
  %1180 = vmatpush1.msra.mxu0 0.0
  %1181 = vmatprep.subr.mxu0 0.0
  %1182 = vmatpush1.msra.mxu0 0.0
  %1183 = vmatprep.subr.mxu0 0.0
  %1184 = vmatpush1.msra.mxu0 0.0
  %1185 = vmatprep.subr.mxu0 0.0
  %1186 = vmatpush1.msra.mxu0 0.0
  %1187 = vmatprep.subr.mxu0 0.0
  %1188 = vmatpush1.msra.mxu0 0.0
  %1189 = vmatprep.subr.mxu0 0.0
  %1190 = vmatpush1.msra.mxu0 0.0
  %1191 = vmatprep.subr.mxu0 0.0
  %1192 = vmatpush1.msra.mxu0 0.0
  %1193 = vmatprep.subr.mxu0 0.0
  %1194 = vmatpush1.msra.mxu0 0.0
  %1195 = vmatprep.subr.mxu0 0.0
  %1196 = vmatpush1.msra.mxu0 0.0
  %1197 = vmatprep.subr.mxu0 0.0
  %1198 = vmatpush1.msra.mxu0 0.0
  %1199 = vmatprep.subr.mxu0 0.0
  %1200 = vmatpush1.msra.mxu0 0.0
  %1201 = vmatprep.subr.mxu0 0.0
  %1202 = vmatpush1.msra.mxu0 0.0
  %1203 = vmatprep.subr.mxu0 0.0
  %1204 = vmatpush1.msra.mxu0 0.0
  %1205 = vmatprep.subr.mxu0 0.0
  %1206 = vmatpush1.msra.mxu0 0.0
  %1207 = vmatprep.mubr.f32.mxu0 0.0
  %1208 = vmatmul.mubr.f32.gmra.mrb[0].mxu0 %v952
  %v1209 = vpop.f32.mrb[0].mxu0
  %v1210 = vadd.f32 %v948, %v1209
  %v1211 = vpop.f32.mrb[0].mxu0
  %1212 = vmatprep.mubr.f32.mxu0 0.0
  %1213 = vmatmul.mubr.f32.gmra.mrb[0].mxu0 %v955
  %v1214 = vpop.f32.mrb[0].mxu0
  %v1215 = vadd.f32 %v948, %v1214
  %v1216 = vpop.f32.mrb[0].mxu0
  %1217 = vmatprep.mubr.f32.mxu0 0.0
  %1218 = vmatmul.mubr.f32.gmra.mrb[0].mxu0 %v958
  %v1219 = vpop.f32.mrb[0].mxu0
  %v1220 = vadd.f32 %v948, %v1219
  %v1221 = vpop.f32.mrb[0].mxu0
  %1222 = vmatprep.mubr.f32.mxu0 0.0
  %1223 = vmatmul.mubr.f32.gmra.mrb[0].mxu0 %v961
  %v1224 = vpop.f32.mrb[0].mxu0
  %v1225 = vadd.f32 %v948, %v1224
  %v1226 = vpop.f32.mrb[0].mxu0
  %1227 = vmatprep.mubr.f32.mxu0 0.0
  %1228 = vmatmul.mubr.f32.gmra.mrb[0].mxu0 %v964
  %v1229 = vpop.f32.mrb[0].mxu0
  %v1230 = vadd.f32 %v948, %v1229
  %v1231 = vpop.f32.mrb[0].mxu0
  %1232 = vmatprep.mubr.f32.mxu0 0.0
  %1233 = vmatmul.mubr.f32.gmra.mrb[0].mxu0 %v967
  %v1234 = vpop.f32.mrb[0].mxu0
  %v1235 = vadd.f32 %v948, %v1234
  %v1236 = vpop.f32.mrb[0].mxu0
  %1237 = vmatprep.mubr.f32.mxu0 0.0
  %1238 = vmatmul.mubr.f32.gmra.mrb[0].mxu0 %v970
  %v1239 = vpop.f32.mrb[0].mxu0
  %v1240 = vadd.f32 %v948, %v1239
  %v1241 = vpop.f32.mrb[0].mxu0
  %1242 = vmatprep.mubr.f32.mxu0 0.0
  %1243 = vmatmul.mubr.f32.gmra.mrb[0].mxu0 %v973
  %v1244 = vpop.f32.mrb[0].mxu0
  %v1245 = vadd.f32 %v948, %v1244
  %v1246 = vpop.f32.mrb[0].mxu0
  %1247 = vmatprep.mubr.f32.mxu0 0.0
  %1248 = vmatmul.mubr.f32.gmra.mrb[0].mxu0 %v976
  %v1249 = vpop.f32.mrb[0].mxu0
  %v1250 = vadd.f32 %v948, %v1249
  %v1251 = vpop.f32.mrb[0].mxu0
  %1252 = vmatprep.mubr.f32.mxu0 0.0
  %1253 = vmatmul.mubr.f32.gmra.mrb[0].mxu0 %v979
  %v1254 = vpop.f32.mrb[0].mxu0
  %v1255 = vadd.f32 %v948, %v1254
  %v1256 = vpop.f32.mrb[0].mxu0
  %1257 = vmatprep.mubr.f32.mxu0 0.0
  %1258 = vmatmul.mubr.f32.gmra.mrb[0].mxu0 %v982
  %v1259 = vpop.f32.mrb[0].mxu0
  %v1260 = vadd.f32 %v948, %v1259
  %v1261 = vpop.f32.mrb[0].mxu0
  %1262 = vmatprep.mubr.f32.mxu0 0.0
  %1263 = vmatmul.mubr.f32.gmra.mrb[0].mxu0 %v985
  %v1264 = vpop.f32.mrb[0].mxu0
  %v1265 = vadd.f32 %v948, %v1264
  %v1266 = vpop.f32.mrb[0].mxu0
  %1267 = vmatprep.mubr.f32.mxu0 0.0
  %1268 = vmatmul.mubr.f32.gmra.mrb[0].mxu0 %v988
  %v1269 = vpop.f32.mrb[0].mxu0
  %v1270 = vadd.f32 %v948, %v1269
  %v1271 = vpop.f32.mrb[0].mxu0
  %1272 = vmatprep.mubr.f32.mxu0 0.0
  %1273 = vmatmul.mubr.f32.gmra.mrb[0].mxu0 %v991
  %v1274 = vpop.f32.mrb[0].mxu0
  %v1275 = vadd.f32 %v948, %v1274
  %v1276 = vpop.f32.mrb[0].mxu0
  %1277 = vmatprep.mubr.f32.mxu0 0.0
  %1278 = vmatmul.mubr.f32.gmra.mrb[0].mxu0 %v994
  %v1279 = vpop.f32.mrb[0].mxu0
  %v1280 = vadd.f32 %v948, %v1279
  %v1281 = vpop.f32.mrb[0].mxu0
  %1282 = vmatprep.mubr.f32.mxu0 0.0
  %1283 = vmatmul.mubr.f32.gmra.mrb[0].mxu0 %v997
  %v1284 = vpop.f32.mrb[0].mxu0
  %v1285 = vadd.f32 %v948, %v1284
  %v1286 = vpop.f32.mrb[0].mxu0
  %1287 = vmatprep.mubr.f32.mxu0 0.0
  %1288 = vmatmul.mubr.f32.gmra.mrb[0].mxu0 %v1000
  %v1289 = vpop.f32.mrb[0].mxu0
  %v1290 = vadd.f32 %v948, %v1289
  %v1291 = vpop.f32.mrb[0].mxu0
  %1292 = vmatprep.mubr.f32.mxu0 0.0
  %1293 = vmatmul.mubr.f32.gmra.mrb[0].mxu0 %v1003
  %v1294 = vpop.f32.mrb[0].mxu0
  %v1295 = vadd.f32 %v948, %v1294
  %v1296 = vpop.f32.mrb[0].mxu0
  %1297 = vmatprep.mubr.f32.mxu0 0.0
  %1298 = vmatmul.mubr.f32.gmra.mrb[0].mxu0 %v1006
  %v1299 = vpop.f32.mrb[0].mxu0
  %v1300 = vadd.f32 %v948, %v1299
  %v1301 = vpop.f32.mrb[0].mxu0
  %1302 = vmatprep.mubr.f32.mxu0 0.0
  %1303 = vmatmul.mubr.f32.gmra.mrb[0].mxu0 %v1009
  %v1304 = vpop.f32.mrb[0].mxu0
  %v1305 = vadd.f32 %v948, %v1304
  %v1306 = vpop.f32.mrb[0].mxu0
  %1307 = vmatprep.mubr.f32.mxu0 0.0
  %1308 = vmatmul.mubr.f32.gmra.mrb[0].mxu0 %v1012
  %v1309 = vpop.f32.mrb[0].mxu0
  %v1310 = vadd.f32 %v948, %v1309
  %v1311 = vpop.f32.mrb[0].mxu0
  %1312 = vmatprep.mubr.f32.mxu0 0.0
  %1313 = vmatmul.mubr.f32.gmra.mrb[0].mxu0 %v1015
  %v1314 = vpop.f32.mrb[0].mxu0
  %v1315 = vadd.f32 %v948, %v1314
  %v1316 = vpop.f32.mrb[0].mxu0
  %1317 = vmatprep.mubr.f32.mxu0 0.0
  %1318 = vmatmul.mubr.f32.gmra.mrb[0].mxu0 %v1018
  %v1319 = vpop.f32.mrb[0].mxu0
  %v1320 = vadd.f32 %v948, %v1319
  %v1321 = vpop.f32.mrb[0].mxu0
  %1322 = vmatprep.mubr.f32.mxu0 0.0
  %1323 = vmatmul.mubr.f32.gmra.mrb[0].mxu0 %v1021
  %v1324 = vpop.f32.mrb[0].mxu0
  %v1325 = vadd.f32 %v948, %v1324
  %v1326 = vpop.f32.mrb[0].mxu0
  %1327 = vmatprep.mubr.f32.mxu0 0.0
  %1328 = vmatmul.mubr.f32.gmra.mrb[0].mxu0 %v1024
  %v1329 = vpop.f32.mrb[0].mxu0
  %v1330 = vadd.f32 %v948, %v1329
  %v1331 = vpop.f32.mrb[0].mxu0
  %1332 = vmatprep.mubr.f32.mxu0 0.0
  %1333 = vmatmul.mubr.f32.gmra.mrb[0].mxu0 %v1027
  %v1334 = vpop.f32.mrb[0].mxu0
  %v1335 = vadd.f32 %v948, %v1334
  %v1336 = vpop.f32.mrb[0].mxu0
  %1337 = vmatprep.mubr.f32.mxu0 0.0
  %1338 = vmatmul.mubr.f32.gmra.mrb[0].mxu0 %v1030
  %v1339 = vpop.f32.mrb[0].mxu0
  %v1340 = vadd.f32 %v948, %v1339
  %v1341 = vpop.f32.mrb[0].mxu0
  %1342 = vmatprep.mubr.f32.mxu0 0.0
  %1343 = vmatmul.mubr.f32.gmra.mrb[0].mxu0 %v1033
  %v1344 = vpop.f32.mrb[0].mxu0
  %v1345 = vadd.f32 %v948, %v1344
  %v1346 = vpop.f32.mrb[0].mxu0
  %1347 = vmatprep.mubr.f32.mxu0 0.0
  %1348 = vmatmul.mubr.f32.gmra.mrb[0].mxu0 %v1036
  %v1349 = vpop.f32.mrb[0].mxu0
  %v1350 = vadd.f32 %v948, %v1349
  %v1351 = vpop.f32.mrb[0].mxu0
  %1352 = vmatprep.mubr.f32.mxu0 0.0
  %1353 = vmatmul.mubr.f32.gmra.mrb[0].mxu0 %v1039
  %v1354 = vpop.f32.mrb[0].mxu0
  %v1355 = vadd.f32 %v948, %v1354
  %v1356 = vpop.f32.mrb[0].mxu0
  %1357 = vmatprep.mubr.f32.mxu0 0.0
  %1358 = vmatmul.mubr.f32.gmra.mrb[0].mxu0 %v1042
  %v1359 = vpop.f32.mrb[0].mxu0
  %v1360 = vadd.f32 %v948, %v1359
  %v1361 = vpop.f32.mrb[0].mxu0
  %1362 = vmatprep.mubr.f32.mxu0 0.0
  %1363 = vmatmul.mubr.f32.gmra.mrb[0].mxu0 %v1045
  %v1364 = vpop.f32.mrb[0].mxu0
  %v1365 = vadd.f32 %v948, %v1364
  %v1366 = vpop.f32.mrb[0].mxu0
  %1367 = vmatprep.mubr.f32.mxu0 0.0
  %1368 = vmatmul.mubr.f32.gmra.mrb[0].mxu0 %v1048
  %v1369 = vpop.f32.mrb[0].mxu0
  %v1370 = vadd.f32 %v948, %v1369
  %v1371 = vpop.f32.mrb[0].mxu0
  %1372 = vmatprep.mubr.f32.mxu0 0.0
  %1373 = vmatmul.mubr.f32.gmra.mrb[0].mxu0 %v1051
  %v1374 = vpop.f32.mrb[0].mxu0
  %v1375 = vadd.f32 %v948, %v1374
  %v1376 = vpop.f32.mrb[0].mxu0
  %1377 = vmatprep.mubr.f32.mxu0 0.0
  %1378 = vmatmul.mubr.f32.gmra.mrb[0].mxu0 %v1054
  %v1379 = vpop.f32.mrb[0].mxu0
  %v1380 = vadd.f32 %v948, %v1379
  %v1381 = vpop.f32.mrb[0].mxu0
  %1382 = vmatprep.mubr.f32.mxu0 0.0
  %1383 = vmatmul.mubr.f32.gmra.mrb[0].mxu0 %v1057
  %v1384 = vpop.f32.mrb[0].mxu0
  %v1385 = vadd.f32 %v948, %v1384
  %v1386 = vpop.f32.mrb[0].mxu0
  %1387 = vmatprep.mubr.f32.mxu0 0.0
  %1388 = vmatmul.mubr.f32.gmra.mrb[0].mxu0 %v1060
  %v1389 = vpop.f32.mrb[0].mxu0
  %v1390 = vadd.f32 %v948, %v1389
  %v1391 = vpop.f32.mrb[0].mxu0
  %1392 = vmatprep.mubr.f32.mxu0 0.0
  %1393 = vmatmul.mubr.f32.gmra.mrb[0].mxu0 %v1063
  %v1394 = vpop.f32.mrb[0].mxu0
  %v1395 = vadd.f32 %v948, %v1394
  %v1396 = vpop.f32.mrb[0].mxu0
  %1397 = vmatprep.mubr.f32.mxu0 0.0
  %1398 = vmatmul.mubr.f32.gmra.mrb[0].mxu0 %v1066
  %v1399 = vpop.f32.mrb[0].mxu0
  %v1400 = vadd.f32 %v948, %v1399
  %v1401 = vpop.f32.mrb[0].mxu0
  %1402 = vmatprep.mubr.f32.mxu0 0.0
  %1403 = vmatmul.mubr.f32.gmra.mrb[0].mxu0 %v1069
  %v1404 = vpop.f32.mrb[0].mxu0
  %v1405 = vadd.f32 %v948, %v1404
  %v1406 = vpop.f32.mrb[0].mxu0
  %1407 = vmatprep.mubr.f32.mxu0 0.0
  %1408 = vmatmul.mubr.f32.gmra.mrb[0].mxu0 %v1072
  %v1409 = vpop.f32.mrb[0].mxu0
  %v1410 = vadd.f32 %v948, %v1409
  %v1411 = vpop.f32.mrb[0].mxu0
  %1412 = vmatprep.mubr.f32.mxu0 0.0
  %1413 = vmatmul.mubr.f32.gmra.mrb[0].mxu0 %v1075
  %v1414 = vpop.f32.mrb[0].mxu0
  %v1415 = vadd.f32 %v948, %v1414
  %v1416 = vpop.f32.mrb[0].mxu0
  %1417 = vmatprep.mubr.f32.mxu0 0.0
  %1418 = vmatmul.mubr.f32.gmra.mrb[0].mxu0 %v1078
  %v1419 = vpop.f32.mrb[0].mxu0
  %v1420 = vadd.f32 %v948, %v1419
  %v1421 = vpop.f32.mrb[0].mxu0
  %1422 = vmatprep.mubr.f32.mxu0 0.0
  %1423 = vmatmul.mubr.f32.gmra.mrb[0].mxu0 %v1081
  %v1424 = vpop.f32.mrb[0].mxu0
  %v1425 = vadd.f32 %v948, %v1424
  %v1426 = vpop.f32.mrb[0].mxu0
  %1427 = vmatprep.mubr.f32.mxu0 0.0
  %1428 = vmatmul.mubr.f32.gmra.mrb[0].mxu0 %v1084
  %v1429 = vpop.f32.mrb[0].mxu0
  %v1430 = vadd.f32 %v948, %v1429
  %v1431 = vpop.f32.mrb[0].mxu0
  %1432 = vmatprep.mubr.f32.mxu0 0.0
  %1433 = vmatmul.mubr.f32.gmra.mrb[0].mxu0 %v1087
  %v1434 = vpop.f32.mrb[0].mxu0
  %v1435 = vadd.f32 %v948, %v1434
  %v1436 = vpop.f32.mrb[0].mxu0
  %1437 = vmatprep.mubr.f32.mxu0 0.0
  %1438 = vmatmul.mubr.f32.gmra.mrb[0].mxu0 %v1090
  %v1439 = vpop.f32.mrb[0].mxu0
  %v1440 = vadd.f32 %v948, %v1439
  %v1441 = vpop.f32.mrb[0].mxu0
  %1442 = vmatprep.mubr.f32.mxu0 0.0
  %1443 = vmatmul.mubr.f32.gmra.mrb[0].mxu0 %v1093
  %v1444 = vpop.f32.mrb[0].mxu0
  %v1445 = vadd.f32 %v948, %v1444
  %v1446 = vpop.f32.mrb[0].mxu0
  %1447 = vmatprep.mubr.f32.mxu0 0.0
  %1448 = vmatmul.mubr.f32.gmra.mrb[0].mxu0 %v1096
  %v1449 = vpop.f32.mrb[0].mxu0
  %v1450 = vadd.f32 %v948, %v1449
  %v1451 = vpop.f32.mrb[0].mxu0
  %1452 = vmatprep.mubr.f32.mxu0 0.0
  %1453 = vmatmul.mubr.f32.gmra.mrb[0].mxu0 %v1099
  %v1454 = vpop.f32.mrb[0].mxu0
  %v1455 = vadd.f32 %v948, %v1454
  %v1456 = vpop.f32.mrb[0].mxu0
  %1457 = vmatprep.mubr.f32.mxu0 0.0
  %1458 = vmatmul.mubr.f32.gmra.mrb[0].mxu0 %v1102
  %v1459 = vpop.f32.mrb[0].mxu0
  %v1460 = vadd.f32 %v948, %v1459
  %v1461 = vpop.f32.mrb[0].mxu0
  %1462 = vmatprep.mubr.f32.mxu0 0.0
  %1463 = vmatmul.mubr.f32.gmra.mrb[0].mxu0 %v1105
  %v1464 = vpop.f32.mrb[0].mxu0
  %v1465 = vadd.f32 %v948, %v1464
  %v1466 = vpop.f32.mrb[0].mxu0
  %1467 = vmatprep.mubr.f32.mxu0 0.0
  %1468 = vmatmul.mubr.f32.gmra.mrb[0].mxu0 %v1108
  %v1469 = vpop.f32.mrb[0].mxu0
  %v1470 = vadd.f32 %v948, %v1469
  %v1471 = vpop.f32.mrb[0].mxu0
  %1472 = vmatprep.mubr.f32.mxu0 0.0
  %1473 = vmatmul.mubr.f32.gmra.mrb[0].mxu0 %v1111
  %v1474 = vpop.f32.mrb[0].mxu0
  %v1475 = vadd.f32 %v948, %v1474
  %v1476 = vpop.f32.mrb[0].mxu0
  %1477 = vmatprep.mubr.f32.mxu0 0.0
  %1478 = vmatmul.mubr.f32.gmra.mrb[0].mxu0 %v1114
  %v1479 = vpop.f32.mrb[0].mxu0
  %v1480 = vadd.f32 %v948, %v1479
  %v1481 = vpop.f32.mrb[0].mxu0
  %1482 = vmatprep.mubr.f32.mxu0 0.0
  %1483 = vmatmul.mubr.f32.gmra.mrb[0].mxu0 %v1117
  %v1484 = vpop.f32.mrb[0].mxu0
  %v1485 = vadd.f32 %v948, %v1484
  %v1486 = vpop.f32.mrb[0].mxu0
  %1487 = vmatprep.mubr.f32.mxu0 0.0
  %1488 = vmatmul.mubr.f32.gmra.mrb[0].mxu0 %v1120
  %v1489 = vpop.f32.mrb[0].mxu0
  %v1490 = vadd.f32 %v948, %v1489
  %v1491 = vpop.f32.mrb[0].mxu0
  %1492 = vmatprep.mubr.f32.mxu0 0.0
  %1493 = vmatmul.mubr.f32.gmra.mrb[0].mxu0 %v1123
  %v1494 = vpop.f32.mrb[0].mxu0
  %v1495 = vadd.f32 %v948, %v1494
  %v1496 = vpop.f32.mrb[0].mxu0
  %1497 = vmatprep.mubr.f32.mxu0 0.0
  %1498 = vmatmul.mubr.f32.gmra.mrb[0].mxu0 %v1126
  %v1499 = vpop.f32.mrb[0].mxu0
  %v1500 = vadd.f32 %v948, %v1499
  %v1501 = vpop.f32.mrb[0].mxu0
  %1502 = vmatprep.mubr.f32.mxu0 0.0
  %1503 = vmatmul.mubr.f32.gmra.mrb[0].mxu0 %v1129
  %v1504 = vpop.f32.mrb[0].mxu0
  %v1505 = vadd.f32 %v948, %v1504
  %v1506 = vpop.f32.mrb[0].mxu0
  %1507 = vmatprep.mubr.f32.mxu0 0.0
  %1508 = vmatmul.mubr.f32.gmra.mrb[0].mxu0 %v1132
  %v1509 = vpop.f32.mrb[0].mxu0
  %v1510 = vadd.f32 %v948, %v1509
  %v1511 = vpop.f32.mrb[0].mxu0
  %1512 = vmatprep.mubr.f32.mxu0 0.0
  %1513 = vmatmul.mubr.f32.gmra.mrb[0].mxu0 %v1135
  %v1514 = vpop.f32.mrb[0].mxu0
  %v1515 = vadd.f32 %v948, %v1514
  %v1516 = vpop.f32.mrb[0].mxu0
  %1517 = vmatprep.mubr.f32.mxu0 0.0
  %1518 = vmatmul.mubr.f32.gmra.mrb[0].mxu0 %v1138
  %v1519 = vpop.f32.mrb[0].mxu0
  %v1520 = vadd.f32 %v948, %v1519
  %v1521 = vpop.f32.mrb[0].mxu0
  %1522 = vmatprep.mubr.f32.mxu0 0.0
  %1523 = vmatmul.mubr.f32.gmra.mrb[0].mxu0 %v1141
  %v1524 = vpop.f32.mrb[0].mxu0
  %v1525 = vadd.f32 %v948, %v1524
  %v1526 = vpop.f32.mrb[0].mxu0
  %1527 = vdwg.mxu0
  %v1528 = vmax.f32 %v1210, 0.0
  %v1529 = vmax.f32 %v1215, 0.0
  %v1530 = vmax.f32 %v1220, 0.0
  %v1531 = vmax.f32 %v1225, 0.0
  %v1532 = vmax.f32 %v1230, 0.0
  %v1533 = vmax.f32 %v1235, 0.0
  %v1534 = vmax.f32 %v1240, 0.0
  %v1535 = vmax.f32 %v1245, 0.0
  %v1536 = vmax.f32 %v1250, 0.0
  %v1537 = vmax.f32 %v1255, 0.0
  %v1538 = vmax.f32 %v1260, 0.0
  %v1539 = vmax.f32 %v1265, 0.0
  %v1540 = vmax.f32 %v1270, 0.0
  %v1541 = vmax.f32 %v1275, 0.0
  %v1542 = vmax.f32 %v1280, 0.0
  %v1543 = vmax.f32 %v1285, 0.0
  %v1544 = vmax.f32 %v1290, 0.0
  %v1545 = vmax.f32 %v1295, 0.0
  %v1546 = vmax.f32 %v1300, 0.0
  %v1547 = vmax.f32 %v1305, 0.0
  %v1548 = vmax.f32 %v1310, 0.0
  %v1549 = vmax.f32 %v1315, 0.0
  %v1550 = vmax.f32 %v1320, 0.0
  %v1551 = vmax.f32 %v1325, 0.0
  %v1552 = vmax.f32 %v1330, 0.0
  %v1553 = vmax.f32 %v1335, 0.0
  %v1554 = vmax.f32 %v1340, 0.0
  %v1555 = vmax.f32 %v1345, 0.0
  %v1556 = vmax.f32 %v1350, 0.0
  %v1557 = vmax.f32 %v1355, 0.0
  %v1558 = vmax.f32 %v1360, 0.0
  %v1559 = vmax.f32 %v1365, 0.0
  %v1560 = vmax.f32 %v1370, 0.0
  %v1561 = vmax.f32 %v1375, 0.0
  %v1562 = vmax.f32 %v1380, 0.0
  %v1563 = vmax.f32 %v1385, 0.0
  %v1564 = vmax.f32 %v1390, 0.0
  %v1565 = vmax.f32 %v1395, 0.0
  %v1566 = vmax.f32 %v1400, 0.0
  %v1567 = vmax.f32 %v1405, 0.0
  %v1568 = vmax.f32 %v1410, 0.0
  %v1569 = vmax.f32 %v1415, 0.0
  %v1570 = vmax.f32 %v1420, 0.0
  %v1571 = vmax.f32 %v1425, 0.0
  %v1572 = vmax.f32 %v1430, 0.0
  %v1573 = vmax.f32 %v1435, 0.0
  %v1574 = vmax.f32 %v1440, 0.0
  %v1575 = vmax.f32 %v1445, 0.0
  %v1576 = vmax.f32 %v1450, 0.0
  %v1577 = vmax.f32 %v1455, 0.0
  %v1578 = vmax.f32 %v1460, 0.0
  %v1579 = vmax.f32 %v1465, 0.0
  %v1580 = vmax.f32 %v1470, 0.0
  %v1581 = vmax.f32 %v1475, 0.0
  %v1582 = vmax.f32 %v1480, 0.0
  %v1583 = vmax.f32 %v1485, 0.0
  %v1584 = vmax.f32 %v1490, 0.0
  %v1585 = vmax.f32 %v1495, 0.0
  %v1586 = vmax.f32 %v1500, 0.0
  %v1587 = vmax.f32 %v1505, 0.0
  %v1588 = vmax.f32 %v1510, 0.0
  %v1589 = vmax.f32 %v1515, 0.0
  %v1590 = vmax.f32 %v1520, 0.0
  %v1591 = vmax.f32 %v1525, 0.0
  %v1592 = vld [vmem:[%s2] sm:$0xff]
  %v1593 = vld [vmem:[%s2 + $0x8] sm:$0xff]
  %v1594 = vld [vmem:[%s2 + $0x10] sm:$0xff]
  %v1595 = vld [vmem:[%s2 + $0x18] sm:$0xff]
  %v1596 = vld [vmem:[%s2 + $0x20] sm:$0xff]
  %v1597 = vld [vmem:[%s2 + $0x28] sm:$0xff]
  %v1598 = vld [vmem:[%s2 + $0x30] sm:$0xff]
  %v1599 = vld [vmem:[%s2 + $0x38] sm:$0xff]
  %v1600 = vld [vmem:[%s2 + $0x40] sm:$0xff]
  %v1601 = vld [vmem:[%s2 + $0x48] sm:$0xff]
  %v1602 = vld [vmem:[%s2 + $0x50] sm:$0xff]
  %v1603 = vld [vmem:[%s2 + $0x58] sm:$0xff]
  %v1604 = vld [vmem:[%s2 + $0x60] sm:$0xff]
  %v1605 = vld [vmem:[%s2 + $0x68] sm:$0xff]
  %v1606 = vld [vmem:[%s2 + $0x70] sm:$0xff]
  %v1607 = vld [vmem:[%s2 + $0x78] sm:$0xff]
  %v1608 = vld [vmem:[%s2 + $0x80] sm:$0xff]
  %v1609 = vld [vmem:[%s2 + $0x88] sm:$0xff]
  %v1610 = vld [vmem:[%s2 + $0x90] sm:$0xff]
  %v1611 = vld [vmem:[%s2 + $0x98] sm:$0xff]
  %v1612 = vld [vmem:[%s2 + $0xa0] sm:$0xff]
  %v1613 = vld [vmem:[%s2 + $0xa8] sm:$0xff]
  %v1614 = vld [vmem:[%s2 + $0xb0] sm:$0xff]
  %v1615 = vld [vmem:[%s2 + $0xb8] sm:$0xff]
  %v1616 = vld [vmem:[%s2 + $0xc0] sm:$0xff]
  %v1617 = vld [vmem:[%s2 + $0xc8] sm:$0xff]
  %v1618 = vld [vmem:[%s2 + $0xd0] sm:$0xff]
  %v1619 = vld [vmem:[%s2 + $0xd8] sm:$0xff]
  %v1620 = vld [vmem:[%s2 + $0xe0] sm:$0xff]
  %v1621 = vld [vmem:[%s2 + $0xe8] sm:$0xff]
  %v1622 = vld [vmem:[%s2 + $0xf0] sm:$0xff]
  %v1623 = vld [vmem:[%s2 + $0xf8] sm:$0xff]
  %v1624 = vld [vmem:[%s2 + $0x100] sm:$0xff]
  %v1625 = vld [vmem:[%s2 + $0x108] sm:$0xff]
  %v1626 = vld [vmem:[%s2 + $0x110] sm:$0xff]
  %v1627 = vld [vmem:[%s2 + $0x118] sm:$0xff]
  %v1628 = vld [vmem:[%s2 + $0x120] sm:$0xff]
  %v1629 = vld [vmem:[%s2 + $0x128] sm:$0xff]
  %v1630 = vld [vmem:[%s2 + $0x130] sm:$0xff]
  %v1631 = vld [vmem:[%s2 + $0x138] sm:$0xff]
  %v1632 = vld [vmem:[%s2 + $0x140] sm:$0xff]
  %v1633 = vld [vmem:[%s2 + $0x148] sm:$0xff]
  %v1634 = vld [vmem:[%s2 + $0x150] sm:$0xff]
  %v1635 = vld [vmem:[%s2 + $0x158] sm:$0xff]
  %v1636 = vld [vmem:[%s2 + $0x160] sm:$0xff]
  %v1637 = vld [vmem:[%s2 + $0x168] sm:$0xff]
  %v1638 = vld [vmem:[%s2 + $0x170] sm:$0xff]
  %v1639 = vld [vmem:[%s2 + $0x178] sm:$0xff]
  %v1640 = vld [vmem:[%s2 + $0x180] sm:$0xff]
  %v1641 = vld [vmem:[%s2 + $0x188] sm:$0xff]
  %v1642 = vld [vmem:[%s2 + $0x190] sm:$0xff]
  %v1643 = vld [vmem:[%s2 + $0x198] sm:$0xff]
  %v1644 = vld [vmem:[%s2 + $0x1a0] sm:$0xff]
  %v1645 = vld [vmem:[%s2 + $0x1a8] sm:$0xff]
  %v1646 = vld [vmem:[%s2 + $0x1b0] sm:$0xff]
  %v1647 = vld [vmem:[%s2 + $0x1b8] sm:$0xff]
  %v1648 = vld [vmem:[%s2 + $0x1c0] sm:$0xff]
  %v1649 = vld [vmem:[%s2 + $0x1c8] sm:$0xff]
  %v1650 = vld [vmem:[%s2 + $0x1d0] sm:$0xff]
  %v1651 = vld [vmem:[%s2 + $0x1d8] sm:$0xff]
  %v1652 = vld [vmem:[%s2 + $0x1e0] sm:$0xff]
  %v1653 = vld [vmem:[%s2 + $0x1e8] sm:$0xff]
  %v1654 = vld [vmem:[%s2 + $0x1f0] sm:$0xff]
  %v1655 = vld [vmem:[%s2 + $0x1f8] sm:$0xff]
  %v1656 = vld [vmem:[%s7] sm:$0xff]
  %v1657 = vld [vmem:[%s7 + $0x8] sm:$0xff]
  %v1658 = vld [vmem:[%s7 + $0x10] sm:$0xff]
  %v1659 = vld [vmem:[%s7 + $0x18] sm:$0xff]
  %v1660 = vld [vmem:[%s3] sm:$0xff]
  %v1661 = vld [vmem:[%s3 + $0x8] sm:$0xff]
  %v1662 = vld [vmem:[%s3 + $0x10] sm:$0xff]
  %v1663 = vld [vmem:[%s3 + $0x18] sm:$0xff]
  %v1664 = vld [vmem:[%s3 + $0x20] sm:$0xff]
  %v1665 = vld [vmem:[%s3 + $0x28] sm:$0xff]
  %v1666 = vld [vmem:[%s3 + $0x30] sm:$0xff]
  %v1667 = vld [vmem:[%s3 + $0x38] sm:$0xff]
  %v1668 = vld [vmem:[%s3 + $0x40] sm:$0xff]
  %v1669 = vld [vmem:[%s3 + $0x48] sm:$0xff]
  %v1670 = vld [vmem:[%s3 + $0x50] sm:$0xff]
  %v1671 = vld [vmem:[%s3 + $0x58] sm:$0xff]
  %v1672 = vld [vmem:[%s3 + $0x60] sm:$0xff]
  %v1673 = vld [vmem:[%s3 + $0x68] sm:$0xff]
  %v1674 = vld [vmem:[%s3 + $0x70] sm:$0xff]
  %v1675 = vld [vmem:[%s3 + $0x78] sm:$0xff]
  %v1676 = vld [vmem:[%s3 + $0x80] sm:$0xff]
  %v1677 = vld [vmem:[%s3 + $0x88] sm:$0xff]
  %v1678 = vld [vmem:[%s3 + $0x90] sm:$0xff]
  %v1679 = vld [vmem:[%s3 + $0x98] sm:$0xff]
  %v1680 = vld [vmem:[%s3 + $0xa0] sm:$0xff]
  %v1681 = vld [vmem:[%s3 + $0xa8] sm:$0xff]
  %v1682 = vld [vmem:[%s3 + $0xb0] sm:$0xff]
  %v1683 = vld [vmem:[%s3 + $0xb8] sm:$0xff]
  %v1684 = vld [vmem:[%s3 + $0xc0] sm:$0xff]
  %v1685 = vld [vmem:[%s3 + $0xc8] sm:$0xff]
  %v1686 = vld [vmem:[%s3 + $0xd0] sm:$0xff]
  %v1687 = vld [vmem:[%s3 + $0xd8] sm:$0xff]
  %v1688 = vld [vmem:[%s3 + $0xe0] sm:$0xff]
  %v1689 = vld [vmem:[%s3 + $0xe8] sm:$0xff]
  %v1690 = vld [vmem:[%s3 + $0xf0] sm:$0xff]
  %v1691 = vld [vmem:[%s3 + $0xf8] sm:$0xff]
  %v1692 = vld [vmem:[%s3 + $0x100] sm:$0xff]
  %v1693 = vld [vmem:[%s3 + $0x108] sm:$0xff]
  %v1694 = vld [vmem:[%s3 + $0x110] sm:$0xff]
  %v1695 = vld [vmem:[%s3 + $0x118] sm:$0xff]
  %v1696 = vld [vmem:[%s3 + $0x120] sm:$0xff]
  %v1697 = vld [vmem:[%s3 + $0x128] sm:$0xff]
  %v1698 = vld [vmem:[%s3 + $0x130] sm:$0xff]
  %v1699 = vld [vmem:[%s3 + $0x138] sm:$0xff]
  %v1700 = vld [vmem:[%s3 + $0x140] sm:$0xff]
  %v1701 = vld [vmem:[%s3 + $0x148] sm:$0xff]
  %v1702 = vld [vmem:[%s3 + $0x150] sm:$0xff]
  %v1703 = vld [vmem:[%s3 + $0x158] sm:$0xff]
  %v1704 = vld [vmem:[%s3 + $0x160] sm:$0xff]
  %v1705 = vld [vmem:[%s3 + $0x168] sm:$0xff]
  %v1706 = vld [vmem:[%s3 + $0x170] sm:$0xff]
  %v1707 = vld [vmem:[%s3 + $0x178] sm:$0xff]
  %v1708 = vld [vmem:[%s3 + $0x180] sm:$0xff]
  %v1709 = vld [vmem:[%s3 + $0x188] sm:$0xff]
  %v1710 = vld [vmem:[%s3 + $0x190] sm:$0xff]
  %v1711 = vld [vmem:[%s3 + $0x198] sm:$0xff]
  %v1712 = vld [vmem:[%s3 + $0x1a0] sm:$0xff]
  %v1713 = vld [vmem:[%s3 + $0x1a8] sm:$0xff]
  %v1714 = vld [vmem:[%s3 + $0x1b0] sm:$0xff]
  %v1715 = vld [vmem:[%s3 + $0x1b8] sm:$0xff]
  %v1716 = vld [vmem:[%s3 + $0x1c0] sm:$0xff]
  %v1717 = vld [vmem:[%s3 + $0x1c8] sm:$0xff]
  %v1718 = vld [vmem:[%s3 + $0x1d0] sm:$0xff]
  %v1719 = vld [vmem:[%s3 + $0x1d8] sm:$0xff]
  %v1720 = vld [vmem:[%s3 + $0x1e0] sm:$0xff]
  %v1721 = vld [vmem:[%s3 + $0x1e8] sm:$0xff]
  %v1722 = vld [vmem:[%s3 + $0x1f0] sm:$0xff]
  %v1723 = vld [vmem:[%s3 + $0x1f8] sm:$0xff]
  %vm1724 = vcmask 261120
  %v1726 = vsel %vm1724, %v1592, 0
  %v1729 = vsel %vm1724, %v1593, 0
  %v1732 = vsel %vm1724, %v1594, 0
  %v1735 = vsel %vm1724, %v1595, 0
  %v1738 = vsel %vm1724, %v1596, 0
  %v1741 = vsel %vm1724, %v1597, 0
  %v1744 = vsel %vm1724, %v1598, 0
  %v1747 = vsel %vm1724, %v1599, 0
  %v1750 = vsel %vm1724, %v1600, 0
  %v1753 = vsel %vm1724, %v1601, 0
  %v1756 = vsel %vm1724, %v1602, 0
  %v1759 = vsel %vm1724, %v1603, 0
  %v1762 = vsel %vm1724, %v1604, 0
  %v1765 = vsel %vm1724, %v1605, 0
  %v1768 = vsel %vm1724, %v1606, 0
  %v1771 = vsel %vm1724, %v1607, 0
  %v1774 = vsel %vm1724, %v1608, 0
  %v1777 = vsel %vm1724, %v1609, 0
  %v1780 = vsel %vm1724, %v1610, 0
  %v1783 = vsel %vm1724, %v1611, 0
  %v1786 = vsel %vm1724, %v1612, 0
  %v1789 = vsel %vm1724, %v1613, 0
  %v1792 = vsel %vm1724, %v1614, 0
  %v1795 = vsel %vm1724, %v1615, 0
  %v1798 = vsel %vm1724, %v1616, 0
  %v1801 = vsel %vm1724, %v1617, 0
  %v1804 = vsel %vm1724, %v1618, 0
  %v1807 = vsel %vm1724, %v1619, 0
  %v1810 = vsel %vm1724, %v1620, 0
  %v1813 = vsel %vm1724, %v1621, 0
  %v1816 = vsel %vm1724, %v1622, 0
  %v1819 = vsel %vm1724, %v1623, 0
  %v1822 = vsel %vm1724, %v1624, 0
  %v1825 = vsel %vm1724, %v1625, 0
  %v1828 = vsel %vm1724, %v1626, 0
  %v1831 = vsel %vm1724, %v1627, 0
  %v1834 = vsel %vm1724, %v1628, 0
  %v1837 = vsel %vm1724, %v1629, 0
  %v1840 = vsel %vm1724, %v1630, 0
  %v1843 = vsel %vm1724, %v1631, 0
  %v1846 = vsel %vm1724, %v1632, 0
  %v1849 = vsel %vm1724, %v1633, 0
  %v1852 = vsel %vm1724, %v1634, 0
  %v1855 = vsel %vm1724, %v1635, 0
  %v1858 = vsel %vm1724, %v1636, 0
  %v1861 = vsel %vm1724, %v1637, 0
  %v1864 = vsel %vm1724, %v1638, 0
  %v1867 = vsel %vm1724, %v1639, 0
  %v1870 = vsel %vm1724, %v1640, 0
  %v1873 = vsel %vm1724, %v1641, 0
  %v1876 = vsel %vm1724, %v1642, 0
  %v1879 = vsel %vm1724, %v1643, 0
  %v1882 = vsel %vm1724, %v1644, 0
  %v1885 = vsel %vm1724, %v1645, 0
  %v1888 = vsel %vm1724, %v1646, 0
  %v1891 = vsel %vm1724, %v1647, 0
  %v1894 = vsel %vm1724, %v1648, 0
  %v1897 = vsel %vm1724, %v1649, 0
  %v1900 = vsel %vm1724, %v1650, 0
  %v1903 = vsel %vm1724, %v1651, 0
  %v1906 = vsel %vm1724, %v1652, 0
  %v1909 = vsel %vm1724, %v1653, 0
  %v1912 = vsel %vm1724, %v1654, 0
  %v1915 = vsel %vm1724, %v1655, 0
  %1917 = vmatprep.subr.mxu0 0.0
  %1918 = vmatpush1.msra.mxu0 %v1656
  %1919 = vmatprep.subr.mxu0 0.0
  %1920 = vmatpush1.msra.mxu0 %v1657
  %1921 = vmatprep.subr.mxu0 0.0
  %1922 = vmatpush1.msra.mxu0 %v1658
  %1923 = vmatprep.subr.mxu0 0.0
  %1924 = vmatpush1.msra.mxu0 %v1659
  %1925 = vmatprep.subr.mxu0 0.0
  %1926 = vmatpush1.msra.mxu0 0.0
  %1927 = vmatprep.subr.mxu0 0.0
  %1928 = vmatpush1.msra.mxu0 0.0
  %1929 = vmatprep.subr.mxu0 0.0
  %1930 = vmatpush1.msra.mxu0 0.0
  %1931 = vmatprep.subr.mxu0 0.0
  %1932 = vmatpush1.msra.mxu0 0.0
  %1933 = vmatprep.subr.mxu0 0.0
  %1934 = vmatpush1.msra.mxu0 0.0
  %1935 = vmatprep.subr.mxu0 0.0
  %1936 = vmatpush1.msra.mxu0 0.0
  %1937 = vmatprep.subr.mxu0 0.0
  %1938 = vmatpush1.msra.mxu0 0.0
  %1939 = vmatprep.subr.mxu0 0.0
  %1940 = vmatpush1.msra.mxu0 0.0
  %1941 = vmatprep.subr.mxu0 0.0
  %1942 = vmatpush1.msra.mxu0 0.0
  %1943 = vmatprep.subr.mxu0 0.0
  %1944 = vmatpush1.msra.mxu0 0.0
  %1945 = vmatprep.subr.mxu0 0.0
  %1946 = vmatpush1.msra.mxu0 0.0
  %1947 = vmatprep.subr.mxu0 0.0
  %1948 = vmatpush1.msra.mxu0 0.0
  %1949 = vmatprep.subr.mxu0 0.0
  %1950 = vmatpush1.msra.mxu0 0.0
  %1951 = vmatprep.subr.mxu0 0.0
  %1952 = vmatpush1.msra.mxu0 0.0
  %1953 = vmatprep.subr.mxu0 0.0
  %1954 = vmatpush1.msra.mxu0 0.0
  %1955 = vmatprep.subr.mxu0 0.0
  %1956 = vmatpush1.msra.mxu0 0.0
  %1957 = vmatprep.subr.mxu0 0.0
  %1958 = vmatpush1.msra.mxu0 0.0
  %1959 = vmatprep.subr.mxu0 0.0
  %1960 = vmatpush1.msra.mxu0 0.0
  %1961 = vmatprep.subr.mxu0 0.0
  %1962 = vmatpush1.msra.mxu0 0.0
  %1963 = vmatprep.subr.mxu0 0.0
  %1964 = vmatpush1.msra.mxu0 0.0
  %1965 = vmatprep.subr.mxu0 0.0
  %1966 = vmatpush1.msra.mxu0 0.0
  %1967 = vmatprep.subr.mxu0 0.0
  %1968 = vmatpush1.msra.mxu0 0.0
  %1969 = vmatprep.subr.mxu0 0.0
  %1970 = vmatpush1.msra.mxu0 0.0
  %1971 = vmatprep.subr.mxu0 0.0
  %1972 = vmatpush1.msra.mxu0 0.0
  %1973 = vmatprep.subr.mxu0 0.0
  %1974 = vmatpush1.msra.mxu0 0.0
  %1975 = vmatprep.subr.mxu0 0.0
  %1976 = vmatpush1.msra.mxu0 0.0
  %1977 = vmatprep.subr.mxu0 0.0
  %1978 = vmatpush1.msra.mxu0 0.0
  %1979 = vmatprep.subr.mxu0 0.0
  %1980 = vmatpush1.msra.mxu0 0.0
  %1981 = vmatprep.mubr.f32.mxu0 0.0
  %1982 = vmatmul.mubr.f32.gmra.mrb[0].mxu0 %v1726
  %v1983 = vpop.f32.mrb[0].mxu0
  %v1984 = vadd.f32 %v1660, %v1983
  %v1985 = vpop.f32.mrb[0].mxu0
  %1986 = vmatprep.mubr.f32.mxu0 0.0
  %1987 = vmatmul.mubr.f32.gmra.mrb[0].mxu0 %v1729
  %v1988 = vpop.f32.mrb[0].mxu0
  %v1989 = vadd.f32 %v1661, %v1988
  %v1990 = vpop.f32.mrb[0].mxu0
  %1991 = vmatprep.mubr.f32.mxu0 0.0
  %1992 = vmatmul.mubr.f32.gmra.mrb[0].mxu0 %v1732
  %v1993 = vpop.f32.mrb[0].mxu0
  %v1994 = vadd.f32 %v1662, %v1993
  %v1995 = vpop.f32.mrb[0].mxu0
  %1996 = vmatprep.mubr.f32.mxu0 0.0
  %1997 = vmatmul.mubr.f32.gmra.mrb[0].mxu0 %v1735
  %v1998 = vpop.f32.mrb[0].mxu0
  %v1999 = vadd.f32 %v1663, %v1998
  %v2000 = vpop.f32.mrb[0].mxu0
  %2001 = vmatprep.mubr.f32.mxu0 0.0
  %2002 = vmatmul.mubr.f32.gmra.mrb[0].mxu0 %v1738
  %v2003 = vpop.f32.mrb[0].mxu0
  %v2004 = vadd.f32 %v1664, %v2003
  %v2005 = vpop.f32.mrb[0].mxu0
  %2006 = vmatprep.mubr.f32.mxu0 0.0
  %2007 = vmatmul.mubr.f32.gmra.mrb[0].mxu0 %v1741
  %v2008 = vpop.f32.mrb[0].mxu0
  %v2009 = vadd.f32 %v1665, %v2008
  %v2010 = vpop.f32.mrb[0].mxu0
  %2011 = vmatprep.mubr.f32.mxu0 0.0
  %2012 = vmatmul.mubr.f32.gmra.mrb[0].mxu0 %v1744
  %v2013 = vpop.f32.mrb[0].mxu0
  %v2014 = vadd.f32 %v1666, %v2013
  %v2015 = vpop.f32.mrb[0].mxu0
  %2016 = vmatprep.mubr.f32.mxu0 0.0
  %2017 = vmatmul.mubr.f32.gmra.mrb[0].mxu0 %v1747
  %v2018 = vpop.f32.mrb[0].mxu0
  %v2019 = vadd.f32 %v1667, %v2018
  %v2020 = vpop.f32.mrb[0].mxu0
  %2021 = vmatprep.mubr.f32.mxu0 0.0
  %2022 = vmatmul.mubr.f32.gmra.mrb[0].mxu0 %v1750
  %v2023 = vpop.f32.mrb[0].mxu0
  %v2024 = vadd.f32 %v1668, %v2023
  %v2025 = vpop.f32.mrb[0].mxu0
  %2026 = vmatprep.mubr.f32.mxu0 0.0
  %2027 = vmatmul.mubr.f32.gmra.mrb[0].mxu0 %v1753
  %v2028 = vpop.f32.mrb[0].mxu0
  %v2029 = vadd.f32 %v1669, %v2028
  %v2030 = vpop.f32.mrb[0].mxu0
  %2031 = vmatprep.mubr.f32.mxu0 0.0
  %2032 = vmatmul.mubr.f32.gmra.mrb[0].mxu0 %v1756
  %v2033 = vpop.f32.mrb[0].mxu0
  %v2034 = vadd.f32 %v1670, %v2033
  %v2035 = vpop.f32.mrb[0].mxu0
  %2036 = vmatprep.mubr.f32.mxu0 0.0
  %2037 = vmatmul.mubr.f32.gmra.mrb[0].mxu0 %v1759
  %v2038 = vpop.f32.mrb[0].mxu0
  %v2039 = vadd.f32 %v1671, %v2038
  %v2040 = vpop.f32.mrb[0].mxu0
  %2041 = vmatprep.mubr.f32.mxu0 0.0
  %2042 = vmatmul.mubr.f32.gmra.mrb[0].mxu0 %v1762
  %v2043 = vpop.f32.mrb[0].mxu0
  %v2044 = vadd.f32 %v1672, %v2043
  %v2045 = vpop.f32.mrb[0].mxu0
  %2046 = vmatprep.mubr.f32.mxu0 0.0
  %2047 = vmatmul.mubr.f32.gmra.mrb[0].mxu0 %v1765
  %v2048 = vpop.f32.mrb[0].mxu0
  %v2049 = vadd.f32 %v1673, %v2048
  %v2050 = vpop.f32.mrb[0].mxu0
  %2051 = vmatprep.mubr.f32.mxu0 0.0
  %2052 = vmatmul.mubr.f32.gmra.mrb[0].mxu0 %v1768
  %v2053 = vpop.f32.mrb[0].mxu0
  %v2054 = vadd.f32 %v1674, %v2053
  %v2055 = vpop.f32.mrb[0].mxu0
  %2056 = vmatprep.mubr.f32.mxu0 0.0
  %2057 = vmatmul.mubr.f32.gmra.mrb[0].mxu0 %v1771
  %v2058 = vpop.f32.mrb[0].mxu0
  %v2059 = vadd.f32 %v1675, %v2058
  %v2060 = vpop.f32.mrb[0].mxu0
  %2061 = vmatprep.mubr.f32.mxu0 0.0
  %2062 = vmatmul.mubr.f32.gmra.mrb[0].mxu0 %v1774
  %v2063 = vpop.f32.mrb[0].mxu0
  %v2064 = vadd.f32 %v1676, %v2063
  %v2065 = vpop.f32.mrb[0].mxu0
  %2066 = vmatprep.mubr.f32.mxu0 0.0
  %2067 = vmatmul.mubr.f32.gmra.mrb[0].mxu0 %v1777
  %v2068 = vpop.f32.mrb[0].mxu0
  %v2069 = vadd.f32 %v1677, %v2068
  %v2070 = vpop.f32.mrb[0].mxu0
  %2071 = vmatprep.mubr.f32.mxu0 0.0
  %2072 = vmatmul.mubr.f32.gmra.mrb[0].mxu0 %v1780
  %v2073 = vpop.f32.mrb[0].mxu0
  %v2074 = vadd.f32 %v1678, %v2073
  %v2075 = vpop.f32.mrb[0].mxu0
  %2076 = vmatprep.mubr.f32.mxu0 0.0
  %2077 = vmatmul.mubr.f32.gmra.mrb[0].mxu0 %v1783
  %v2078 = vpop.f32.mrb[0].mxu0
  %v2079 = vadd.f32 %v1679, %v2078
  %v2080 = vpop.f32.mrb[0].mxu0
  %2081 = vmatprep.mubr.f32.mxu0 0.0
  %2082 = vmatmul.mubr.f32.gmra.mrb[0].mxu0 %v1786
  %v2083 = vpop.f32.mrb[0].mxu0
  %v2084 = vadd.f32 %v1680, %v2083
  %v2085 = vpop.f32.mrb[0].mxu0
  %2086 = vmatprep.mubr.f32.mxu0 0.0
  %2087 = vmatmul.mubr.f32.gmra.mrb[0].mxu0 %v1789
  %v2088 = vpop.f32.mrb[0].mxu0
  %v2089 = vadd.f32 %v1681, %v2088
  %v2090 = vpop.f32.mrb[0].mxu0
  %2091 = vmatprep.mubr.f32.mxu0 0.0
  %2092 = vmatmul.mubr.f32.gmra.mrb[0].mxu0 %v1792
  %v2093 = vpop.f32.mrb[0].mxu0
  %v2094 = vadd.f32 %v1682, %v2093
  %v2095 = vpop.f32.mrb[0].mxu0
  %2096 = vmatprep.mubr.f32.mxu0 0.0
  %2097 = vmatmul.mubr.f32.gmra.mrb[0].mxu0 %v1795
  %v2098 = vpop.f32.mrb[0].mxu0
  %v2099 = vadd.f32 %v1683, %v2098
  %v2100 = vpop.f32.mrb[0].mxu0
  %2101 = vmatprep.mubr.f32.mxu0 0.0
  %2102 = vmatmul.mubr.f32.gmra.mrb[0].mxu0 %v1798
  %v2103 = vpop.f32.mrb[0].mxu0
  %v2104 = vadd.f32 %v1684, %v2103
  %v2105 = vpop.f32.mrb[0].mxu0
  %2106 = vmatprep.mubr.f32.mxu0 0.0
  %2107 = vmatmul.mubr.f32.gmra.mrb[0].mxu0 %v1801
  %v2108 = vpop.f32.mrb[0].mxu0
  %v2109 = vadd.f32 %v1685, %v2108
  %v2110 = vpop.f32.mrb[0].mxu0
  %2111 = vmatprep.mubr.f32.mxu0 0.0
  %2112 = vmatmul.mubr.f32.gmra.mrb[0].mxu0 %v1804
  %v2113 = vpop.f32.mrb[0].mxu0
  %v2114 = vadd.f32 %v1686, %v2113
  %v2115 = vpop.f32.mrb[0].mxu0
  %2116 = vmatprep.mubr.f32.mxu0 0.0
  %2117 = vmatmul.mubr.f32.gmra.mrb[0].mxu0 %v1807
  %v2118 = vpop.f32.mrb[0].mxu0
  %v2119 = vadd.f32 %v1687, %v2118
  %v2120 = vpop.f32.mrb[0].mxu0
  %2121 = vmatprep.mubr.f32.mxu0 0.0
  %2122 = vmatmul.mubr.f32.gmra.mrb[0].mxu0 %v1810
  %v2123 = vpop.f32.mrb[0].mxu0
  %v2124 = vadd.f32 %v1688, %v2123
  %v2125 = vpop.f32.mrb[0].mxu0
  %2126 = vmatprep.mubr.f32.mxu0 0.0
  %2127 = vmatmul.mubr.f32.gmra.mrb[0].mxu0 %v1813
  %v2128 = vpop.f32.mrb[0].mxu0
  %v2129 = vadd.f32 %v1689, %v2128
  %v2130 = vpop.f32.mrb[0].mxu0
  %2131 = vmatprep.mubr.f32.mxu0 0.0
  %2132 = vmatmul.mubr.f32.gmra.mrb[0].mxu0 %v1816
  %v2133 = vpop.f32.mrb[0].mxu0
  %v2134 = vadd.f32 %v1690, %v2133
  %v2135 = vpop.f32.mrb[0].mxu0
  %2136 = vmatprep.mubr.f32.mxu0 0.0
  %2137 = vmatmul.mubr.f32.gmra.mrb[0].mxu0 %v1819
  %v2138 = vpop.f32.mrb[0].mxu0
  %v2139 = vadd.f32 %v1691, %v2138
  %v2140 = vpop.f32.mrb[0].mxu0
  %2141 = vmatprep.mubr.f32.mxu0 0.0
  %2142 = vmatmul.mubr.f32.gmra.mrb[0].mxu0 %v1822
  %v2143 = vpop.f32.mrb[0].mxu0
  %v2144 = vadd.f32 %v1692, %v2143
  %v2145 = vpop.f32.mrb[0].mxu0
  %2146 = vmatprep.mubr.f32.mxu0 0.0
  %2147 = vmatmul.mubr.f32.gmra.mrb[0].mxu0 %v1825
  %v2148 = vpop.f32.mrb[0].mxu0
  %v2149 = vadd.f32 %v1693, %v2148
  %v2150 = vpop.f32.mrb[0].mxu0
  %2151 = vmatprep.mubr.f32.mxu0 0.0
  %2152 = vmatmul.mubr.f32.gmra.mrb[0].mxu0 %v1828
  %v2153 = vpop.f32.mrb[0].mxu0
  %v2154 = vadd.f32 %v1694, %v2153
  %v2155 = vpop.f32.mrb[0].mxu0
  %2156 = vmatprep.mubr.f32.mxu0 0.0
  %2157 = vmatmul.mubr.f32.gmra.mrb[0].mxu0 %v1831
  %v2158 = vpop.f32.mrb[0].mxu0
  %v2159 = vadd.f32 %v1695, %v2158
  %v2160 = vpop.f32.mrb[0].mxu0
  %2161 = vmatprep.mubr.f32.mxu0 0.0
  %2162 = vmatmul.mubr.f32.gmra.mrb[0].mxu0 %v1834
  %v2163 = vpop.f32.mrb[0].mxu0
  %v2164 = vadd.f32 %v1696, %v2163
  %v2165 = vpop.f32.mrb[0].mxu0
  %2166 = vmatprep.mubr.f32.mxu0 0.0
  %2167 = vmatmul.mubr.f32.gmra.mrb[0].mxu0 %v1837
  %v2168 = vpop.f32.mrb[0].mxu0
  %v2169 = vadd.f32 %v1697, %v2168
  %v2170 = vpop.f32.mrb[0].mxu0
  %2171 = vmatprep.mubr.f32.mxu0 0.0
  %2172 = vmatmul.mubr.f32.gmra.mrb[0].mxu0 %v1840
  %v2173 = vpop.f32.mrb[0].mxu0
  %v2174 = vadd.f32 %v1698, %v2173
  %v2175 = vpop.f32.mrb[0].mxu0
  %2176 = vmatprep.mubr.f32.mxu0 0.0
  %2177 = vmatmul.mubr.f32.gmra.mrb[0].mxu0 %v1843
  %v2178 = vpop.f32.mrb[0].mxu0
  %v2179 = vadd.f32 %v1699, %v2178
  %v2180 = vpop.f32.mrb[0].mxu0
  %2181 = vmatprep.mubr.f32.mxu0 0.0
  %2182 = vmatmul.mubr.f32.gmra.mrb[0].mxu0 %v1846
  %v2183 = vpop.f32.mrb[0].mxu0
  %v2184 = vadd.f32 %v1700, %v2183
  %v2185 = vpop.f32.mrb[0].mxu0
  %2186 = vmatprep.mubr.f32.mxu0 0.0
  %2187 = vmatmul.mubr.f32.gmra.mrb[0].mxu0 %v1849
  %v2188 = vpop.f32.mrb[0].mxu0
  %v2189 = vadd.f32 %v1701, %v2188
  %v2190 = vpop.f32.mrb[0].mxu0
  %2191 = vmatprep.mubr.f32.mxu0 0.0
  %2192 = vmatmul.mubr.f32.gmra.mrb[0].mxu0 %v1852
  %v2193 = vpop.f32.mrb[0].mxu0
  %v2194 = vadd.f32 %v1702, %v2193
  %v2195 = vpop.f32.mrb[0].mxu0
  %2196 = vmatprep.mubr.f32.mxu0 0.0
  %2197 = vmatmul.mubr.f32.gmra.mrb[0].mxu0 %v1855
  %v2198 = vpop.f32.mrb[0].mxu0
  %v2199 = vadd.f32 %v1703, %v2198
  %v2200 = vpop.f32.mrb[0].mxu0
  %2201 = vmatprep.mubr.f32.mxu0 0.0
  %2202 = vmatmul.mubr.f32.gmra.mrb[0].mxu0 %v1858
  %v2203 = vpop.f32.mrb[0].mxu0
  %v2204 = vadd.f32 %v1704, %v2203
  %v2205 = vpop.f32.mrb[0].mxu0
  %2206 = vmatprep.mubr.f32.mxu0 0.0
  %2207 = vmatmul.mubr.f32.gmra.mrb[0].mxu0 %v1861
  %v2208 = vpop.f32.mrb[0].mxu0
  %v2209 = vadd.f32 %v1705, %v2208
  %v2210 = vpop.f32.mrb[0].mxu0
  %2211 = vmatprep.mubr.f32.mxu0 0.0
  %2212 = vmatmul.mubr.f32.gmra.mrb[0].mxu0 %v1864
  %v2213 = vpop.f32.mrb[0].mxu0
  %v2214 = vadd.f32 %v1706, %v2213
  %v2215 = vpop.f32.mrb[0].mxu0
  %2216 = vmatprep.mubr.f32.mxu0 0.0
  %2217 = vmatmul.mubr.f32.gmra.mrb[0].mxu0 %v1867
  %v2218 = vpop.f32.mrb[0].mxu0
  %v2219 = vadd.f32 %v1707, %v2218
  %v2220 = vpop.f32.mrb[0].mxu0
  %2221 = vmatprep.mubr.f32.mxu0 0.0
  %2222 = vmatmul.mubr.f32.gmra.mrb[0].mxu0 %v1870
  %v2223 = vpop.f32.mrb[0].mxu0
  %v2224 = vadd.f32 %v1708, %v2223
  %v2225 = vpop.f32.mrb[0].mxu0
  %2226 = vmatprep.mubr.f32.mxu0 0.0
  %2227 = vmatmul.mubr.f32.gmra.mrb[0].mxu0 %v1873
  %v2228 = vpop.f32.mrb[0].mxu0
  %v2229 = vadd.f32 %v1709, %v2228
  %v2230 = vpop.f32.mrb[0].mxu0
  %2231 = vmatprep.mubr.f32.mxu0 0.0
  %2232 = vmatmul.mubr.f32.gmra.mrb[0].mxu0 %v1876
  %v2233 = vpop.f32.mrb[0].mxu0
  %v2234 = vadd.f32 %v1710, %v2233
  %v2235 = vpop.f32.mrb[0].mxu0
  %2236 = vmatprep.mubr.f32.mxu0 0.0
  %2237 = vmatmul.mubr.f32.gmra.mrb[0].mxu0 %v1879
  %v2238 = vpop.f32.mrb[0].mxu0
  %v2239 = vadd.f32 %v1711, %v2238
  %v2240 = vpop.f32.mrb[0].mxu0
  %2241 = vmatprep.mubr.f32.mxu0 0.0
  %2242 = vmatmul.mubr.f32.gmra.mrb[0].mxu0 %v1882
  %v2243 = vpop.f32.mrb[0].mxu0
  %v2244 = vadd.f32 %v1712, %v2243
  %v2245 = vpop.f32.mrb[0].mxu0
  %2246 = vmatprep.mubr.f32.mxu0 0.0
  %2247 = vmatmul.mubr.f32.gmra.mrb[0].mxu0 %v1885
  %v2248 = vpop.f32.mrb[0].mxu0
  %v2249 = vadd.f32 %v1713, %v2248
  %v2250 = vpop.f32.mrb[0].mxu0
  %2251 = vmatprep.mubr.f32.mxu0 0.0
  %2252 = vmatmul.mubr.f32.gmra.mrb[0].mxu0 %v1888
  %v2253 = vpop.f32.mrb[0].mxu0
  %v2254 = vadd.f32 %v1714, %v2253
  %v2255 = vpop.f32.mrb[0].mxu0
  %2256 = vmatprep.mubr.f32.mxu0 0.0
  %2257 = vmatmul.mubr.f32.gmra.mrb[0].mxu0 %v1891
  %v2258 = vpop.f32.mrb[0].mxu0
  %v2259 = vadd.f32 %v1715, %v2258
  %v2260 = vpop.f32.mrb[0].mxu0
  %2261 = vmatprep.mubr.f32.mxu0 0.0
  %2262 = vmatmul.mubr.f32.gmra.mrb[0].mxu0 %v1894
  %v2263 = vpop.f32.mrb[0].mxu0
  %v2264 = vadd.f32 %v1716, %v2263
  %v2265 = vpop.f32.mrb[0].mxu0
  %2266 = vmatprep.mubr.f32.mxu0 0.0
  %2267 = vmatmul.mubr.f32.gmra.mrb[0].mxu0 %v1897
  %v2268 = vpop.f32.mrb[0].mxu0
  %v2269 = vadd.f32 %v1717, %v2268
  %v2270 = vpop.f32.mrb[0].mxu0
  %2271 = vmatprep.mubr.f32.mxu0 0.0
  %2272 = vmatmul.mubr.f32.gmra.mrb[0].mxu0 %v1900
  %v2273 = vpop.f32.mrb[0].mxu0
  %v2274 = vadd.f32 %v1718, %v2273
  %v2275 = vpop.f32.mrb[0].mxu0
  %2276 = vmatprep.mubr.f32.mxu0 0.0
  %2277 = vmatmul.mubr.f32.gmra.mrb[0].mxu0 %v1903
  %v2278 = vpop.f32.mrb[0].mxu0
  %v2279 = vadd.f32 %v1719, %v2278
  %v2280 = vpop.f32.mrb[0].mxu0
  %2281 = vmatprep.mubr.f32.mxu0 0.0
  %2282 = vmatmul.mubr.f32.gmra.mrb[0].mxu0 %v1906
  %v2283 = vpop.f32.mrb[0].mxu0
  %v2284 = vadd.f32 %v1720, %v2283
  %v2285 = vpop.f32.mrb[0].mxu0
  %2286 = vmatprep.mubr.f32.mxu0 0.0
  %2287 = vmatmul.mubr.f32.gmra.mrb[0].mxu0 %v1909
  %v2288 = vpop.f32.mrb[0].mxu0
  %v2289 = vadd.f32 %v1721, %v2288
  %v2290 = vpop.f32.mrb[0].mxu0
  %2291 = vmatprep.mubr.f32.mxu0 0.0
  %2292 = vmatmul.mubr.f32.gmra.mrb[0].mxu0 %v1912
  %v2293 = vpop.f32.mrb[0].mxu0
  %v2294 = vadd.f32 %v1722, %v2293
  %v2295 = vpop.f32.mrb[0].mxu0
  %2296 = vmatprep.mubr.f32.mxu0 0.0
  %2297 = vmatmul.mubr.f32.gmra.mrb[0].mxu0 %v1915
  %v2298 = vpop.f32.mrb[0].mxu0
  %v2299 = vadd.f32 %v1723, %v2298
  %v2300 = vpop.f32.mrb[0].mxu0
  %2301 = vdwg.mxu0
  %v2302 = vld [vmem:[%s4] sm:$0xff]
  %v2303 = vld [vmem:[%s4 + $0x8] sm:$0xff]
  %v2304 = vld [vmem:[%s4 + $0x10] sm:$0xff]
  %v2305 = vld [vmem:[%s4 + $0x18] sm:$0xff]
  %v2306 = vld [vmem:[%s4 + $0x20] sm:$0xff]
  %v2307 = vld [vmem:[%s4 + $0x28] sm:$0xff]
  %v2308 = vld [vmem:[%s4 + $0x30] sm:$0xff]
  %v2309 = vld [vmem:[%s4 + $0x38] sm:$0xff]
  %v2310 = vld [vmem:[%s4 + $0x40] sm:$0xff]
  %v2311 = vld [vmem:[%s4 + $0x48] sm:$0xff]
  %v2312 = vld [vmem:[%s4 + $0x50] sm:$0xff]
  %v2313 = vld [vmem:[%s4 + $0x58] sm:$0xff]
  %v2314 = vld [vmem:[%s4 + $0x60] sm:$0xff]
  %v2315 = vld [vmem:[%s4 + $0x68] sm:$0xff]
  %v2316 = vld [vmem:[%s4 + $0x70] sm:$0xff]
  %v2317 = vld [vmem:[%s4 + $0x78] sm:$0xff]
  %v2318 = vld [vmem:[%s4 + $0x80] sm:$0xff]
  %v2319 = vld [vmem:[%s4 + $0x88] sm:$0xff]
  %v2320 = vld [vmem:[%s4 + $0x90] sm:$0xff]
  %v2321 = vld [vmem:[%s4 + $0x98] sm:$0xff]
  %v2322 = vld [vmem:[%s4 + $0xa0] sm:$0xff]
  %v2323 = vld [vmem:[%s4 + $0xa8] sm:$0xff]
  %v2324 = vld [vmem:[%s4 + $0xb0] sm:$0xff]
  %v2325 = vld [vmem:[%s4 + $0xb8] sm:$0xff]
  %v2326 = vld [vmem:[%s4 + $0xc0] sm:$0xff]
  %v2327 = vld [vmem:[%s4 + $0xc8] sm:$0xff]
  %v2328 = vld [vmem:[%s4 + $0xd0] sm:$0xff]
  %v2329 = vld [vmem:[%s4 + $0xd8] sm:$0xff]
  %v2330 = vld [vmem:[%s4 + $0xe0] sm:$0xff]
  %v2331 = vld [vmem:[%s4 + $0xe8] sm:$0xff]
  %v2332 = vld [vmem:[%s4 + $0xf0] sm:$0xff]
  %v2333 = vld [vmem:[%s4 + $0xf8] sm:$0xff]
  %v2334 = vld [vmem:[%s4 + $0x100] sm:$0xff]
  %v2335 = vld [vmem:[%s4 + $0x108] sm:$0xff]
  %v2336 = vld [vmem:[%s4 + $0x110] sm:$0xff]
  %v2337 = vld [vmem:[%s4 + $0x118] sm:$0xff]
  %v2338 = vld [vmem:[%s4 + $0x120] sm:$0xff]
  %v2339 = vld [vmem:[%s4 + $0x128] sm:$0xff]
  %v2340 = vld [vmem:[%s4 + $0x130] sm:$0xff]
  %v2341 = vld [vmem:[%s4 + $0x138] sm:$0xff]
  %v2342 = vld [vmem:[%s4 + $0x140] sm:$0xff]
  %v2343 = vld [vmem:[%s4 + $0x148] sm:$0xff]
  %v2344 = vld [vmem:[%s4 + $0x150] sm:$0xff]
  %v2345 = vld [vmem:[%s4 + $0x158] sm:$0xff]
  %v2346 = vld [vmem:[%s4 + $0x160] sm:$0xff]
  %v2347 = vld [vmem:[%s4 + $0x168] sm:$0xff]
  %v2348 = vld [vmem:[%s4 + $0x170] sm:$0xff]
  %v2349 = vld [vmem:[%s4 + $0x178] sm:$0xff]
  %v2350 = vld [vmem:[%s4 + $0x180] sm:$0xff]
  %v2351 = vld [vmem:[%s4 + $0x188] sm:$0xff]
  %v2352 = vld [vmem:[%s4 + $0x190] sm:$0xff]
  %v2353 = vld [vmem:[%s4 + $0x198] sm:$0xff]
  %v2354 = vld [vmem:[%s4 + $0x1a0] sm:$0xff]
  %v2355 = vld [vmem:[%s4 + $0x1a8] sm:$0xff]
  %v2356 = vld [vmem:[%s4 + $0x1b0] sm:$0xff]
  %v2357 = vld [vmem:[%s4 + $0x1b8] sm:$0xff]
  %v2358 = vld [vmem:[%s4 + $0x1c0] sm:$0xff]
  %v2359 = vld [vmem:[%s4 + $0x1c8] sm:$0xff]
  %v2360 = vld [vmem:[%s4 + $0x1d0] sm:$0xff]
  %v2361 = vld [vmem:[%s4 + $0x1d8] sm:$0xff]
  %v2362 = vld [vmem:[%s4 + $0x1e0] sm:$0xff]
  %v2363 = vld [vmem:[%s4 + $0x1e8] sm:$0xff]
  %v2364 = vld [vmem:[%s4 + $0x1f0] sm:$0xff]
  %v2365 = vld [vmem:[%s4 + $0x1f8] sm:$0xff]
  %v2366 = vadd.f32 %v1984, %v2302
  %v2367 = vadd.f32 %v1989, %v2303
  %v2368 = vadd.f32 %v1994, %v2304
  %v2369 = vadd.f32 %v1999, %v2305
  %v2370 = vadd.f32 %v2004, %v2306
  %v2371 = vadd.f32 %v2009, %v2307
  %v2372 = vadd.f32 %v2014, %v2308
  %v2373 = vadd.f32 %v2019, %v2309
  %v2374 = vadd.f32 %v2024, %v2310
  %v2375 = vadd.f32 %v2029, %v2311
  %v2376 = vadd.f32 %v2034, %v2312
  %v2377 = vadd.f32 %v2039, %v2313
  %v2378 = vadd.f32 %v2044, %v2314
  %v2379 = vadd.f32 %v2049, %v2315
  %v2380 = vadd.f32 %v2054, %v2316
  %v2381 = vadd.f32 %v2059, %v2317
  %v2382 = vadd.f32 %v2064, %v2318
  %v2383 = vadd.f32 %v2069, %v2319
  %v2384 = vadd.f32 %v2074, %v2320
  %v2385 = vadd.f32 %v2079, %v2321
  %v2386 = vadd.f32 %v2084, %v2322
  %v2387 = vadd.f32 %v2089, %v2323
  %v2388 = vadd.f32 %v2094, %v2324
  %v2389 = vadd.f32 %v2099, %v2325
  %v2390 = vadd.f32 %v2104, %v2326
  %v2391 = vadd.f32 %v2109, %v2327
  %v2392 = vadd.f32 %v2114, %v2328
  %v2393 = vadd.f32 %v2119, %v2329
  %v2394 = vadd.f32 %v2124, %v2330
  %v2395 = vadd.f32 %v2129, %v2331
  %v2396 = vadd.f32 %v2134, %v2332
  %v2397 = vadd.f32 %v2139, %v2333
  %v2398 = vadd.f32 %v2144, %v2334
  %v2399 = vadd.f32 %v2149, %v2335
  %v2400 = vadd.f32 %v2154, %v2336
  %v2401 = vadd.f32 %v2159, %v2337
  %v2402 = vadd.f32 %v2164, %v2338
  %v2403 = vadd.f32 %v2169, %v2339
  %v2404 = vadd.f32 %v2174, %v2340
  %v2405 = vadd.f32 %v2179, %v2341
  %v2406 = vadd.f32 %v2184, %v2342
  %v2407 = vadd.f32 %v2189, %v2343
  %v2408 = vadd.f32 %v2194, %v2344
  %v2409 = vadd.f32 %v2199, %v2345
  %v2410 = vadd.f32 %v2204, %v2346
  %v2411 = vadd.f32 %v2209, %v2347
  %v2412 = vadd.f32 %v2214, %v2348
  %v2413 = vadd.f32 %v2219, %v2349
  %v2414 = vadd.f32 %v2224, %v2350
  %v2415 = vadd.f32 %v2229, %v2351
  %v2416 = vadd.f32 %v2234, %v2352
  %v2417 = vadd.f32 %v2239, %v2353
  %v2418 = vadd.f32 %v2244, %v2354
  %v2419 = vadd.f32 %v2249, %v2355
  %v2420 = vadd.f32 %v2254, %v2356
  %v2421 = vadd.f32 %v2259, %v2357
  %v2422 = vadd.f32 %v2264, %v2358
  %v2423 = vadd.f32 %v2269, %v2359
  %v2424 = vadd.f32 %v2274, %v2360
  %v2425 = vadd.f32 %v2279, %v2361
  %v2426 = vadd.f32 %v2284, %v2362
  %v2427 = vadd.f32 %v2289, %v2363
  %v2428 = vadd.f32 %v2294, %v2364
  %v2429 = vadd.f32 %v2299, %v2365
  %v2430 = vadd.f32 %v2366, %v1528
  %v2431 = vadd.f32 %v2367, %v1529
  %v2432 = vadd.f32 %v2368, %v1530
  %v2433 = vadd.f32 %v2369, %v1531
  %v2434 = vadd.f32 %v2370, %v1532
  %v2435 = vadd.f32 %v2371, %v1533
  %v2436 = vadd.f32 %v2372, %v1534
  %v2437 = vadd.f32 %v2373, %v1535
  %v2438 = vadd.f32 %v2374, %v1536
  %v2439 = vadd.f32 %v2375, %v1537
  %v2440 = vadd.f32 %v2376, %v1538
  %v2441 = vadd.f32 %v2377, %v1539
  %v2442 = vadd.f32 %v2378, %v1540
  %v2443 = vadd.f32 %v2379, %v1541
  %v2444 = vadd.f32 %v2380, %v1542
  %v2445 = vadd.f32 %v2381, %v1543
  %v2446 = vadd.f32 %v2382, %v1544
  %v2447 = vadd.f32 %v2383, %v1545
  %v2448 = vadd.f32 %v2384, %v1546
  %v2449 = vadd.f32 %v2385, %v1547
  %v2450 = vadd.f32 %v2386, %v1548
  %v2451 = vadd.f32 %v2387, %v1549
  %v2452 = vadd.f32 %v2388, %v1550
  %v2453 = vadd.f32 %v2389, %v1551
  %v2454 = vadd.f32 %v2390, %v1552
  %v2455 = vadd.f32 %v2391, %v1553
  %v2456 = vadd.f32 %v2392, %v1554
  %v2457 = vadd.f32 %v2393, %v1555
  %v2458 = vadd.f32 %v2394, %v1556
  %v2459 = vadd.f32 %v2395, %v1557
  %v2460 = vadd.f32 %v2396, %v1558
  %v2461 = vadd.f32 %v2397, %v1559
  %v2462 = vadd.f32 %v2398, %v1560
  %v2463 = vadd.f32 %v2399, %v1561
  %v2464 = vadd.f32 %v2400, %v1562
  %v2465 = vadd.f32 %v2401, %v1563
  %v2466 = vadd.f32 %v2402, %v1564
  %v2467 = vadd.f32 %v2403, %v1565
  %v2468 = vadd.f32 %v2404, %v1566
  %v2469 = vadd.f32 %v2405, %v1567
  %v2470 = vadd.f32 %v2406, %v1568
  %v2471 = vadd.f32 %v2407, %v1569
  %v2472 = vadd.f32 %v2408, %v1570
  %v2473 = vadd.f32 %v2409, %v1571
  %v2474 = vadd.f32 %v2410, %v1572
  %v2475 = vadd.f32 %v2411, %v1573
  %v2476 = vadd.f32 %v2412, %v1574
  %v2477 = vadd.f32 %v2413, %v1575
  %v2478 = vadd.f32 %v2414, %v1576
  %v2479 = vadd.f32 %v2415, %v1577
  %v2480 = vadd.f32 %v2416, %v1578
  %v2481 = vadd.f32 %v2417, %v1579
  %v2482 = vadd.f32 %v2418, %v1580
  %v2483 = vadd.f32 %v2419, %v1581
  %v2484 = vadd.f32 %v2420, %v1582
  %v2485 = vadd.f32 %v2421, %v1583
  %v2486 = vadd.f32 %v2422, %v1584
  %v2487 = vadd.f32 %v2423, %v1585
  %v2488 = vadd.f32 %v2424, %v1586
  %v2489 = vadd.f32 %v2425, %v1587
  %v2490 = vadd.f32 %v2426, %v1588
  %v2491 = vadd.f32 %v2427, %v1589
  %v2492 = vadd.f32 %v2428, %v1590
  %v2493 = vadd.f32 %v2429, %v1591
  %v2494 = vld [vmem:[%s8] sm:$0x1]
  %v2496 = vlaneseq
  %v2497 = vshrl.u32 %v2496, 7
  %v2498 = vsub.s32 0, %v2497
  %v2499 = vrot.slane %v2494, %v2498
  %v2501 = vadd.f32 %v2430, %v2499
  %v2502 = vadd.f32 %v2431, %v2499
  %v2503 = vadd.f32 %v2432, %v2499
  %v2504 = vadd.f32 %v2433, %v2499
  %v2505 = vadd.f32 %v2434, %v2499
  %v2506 = vadd.f32 %v2435, %v2499
  %v2507 = vadd.f32 %v2436, %v2499
  %v2508 = vadd.f32 %v2437, %v2499
  %v2509 = vadd.f32 %v2438, %v2499
  %v2510 = vadd.f32 %v2439, %v2499
  %v2511 = vadd.f32 %v2440, %v2499
  %v2512 = vadd.f32 %v2441, %v2499
  %v2513 = vadd.f32 %v2442, %v2499
  %v2514 = vadd.f32 %v2443, %v2499
  %v2515 = vadd.f32 %v2444, %v2499
  %v2516 = vadd.f32 %v2445, %v2499
  %v2517 = vadd.f32 %v2446, %v2499
  %v2518 = vadd.f32 %v2447, %v2499
  %v2519 = vadd.f32 %v2448, %v2499
  %v2520 = vadd.f32 %v2449, %v2499
  %v2521 = vadd.f32 %v2450, %v2499
  %v2522 = vadd.f32 %v2451, %v2499
  %v2523 = vadd.f32 %v2452, %v2499
  %v2524 = vadd.f32 %v2453, %v2499
  %v2525 = vadd.f32 %v2454, %v2499
  %v2526 = vadd.f32 %v2455, %v2499
  %v2527 = vadd.f32 %v2456, %v2499
  %v2528 = vadd.f32 %v2457, %v2499
  %v2529 = vadd.f32 %v2458, %v2499
  %v2530 = vadd.f32 %v2459, %v2499
  %v2531 = vadd.f32 %v2460, %v2499
  %v2532 = vadd.f32 %v2461, %v2499
  %v2533 = vadd.f32 %v2462, %v2499
  %v2534 = vadd.f32 %v2463, %v2499
  %v2535 = vadd.f32 %v2464, %v2499
  %v2536 = vadd.f32 %v2465, %v2499
  %v2537 = vadd.f32 %v2466, %v2499
  %v2538 = vadd.f32 %v2467, %v2499
  %v2539 = vadd.f32 %v2468, %v2499
  %v2540 = vadd.f32 %v2469, %v2499
  %v2541 = vadd.f32 %v2470, %v2499
  %v2542 = vadd.f32 %v2471, %v2499
  %v2543 = vadd.f32 %v2472, %v2499
  %v2544 = vadd.f32 %v2473, %v2499
  %v2545 = vadd.f32 %v2474, %v2499
  %v2546 = vadd.f32 %v2475, %v2499
  %v2547 = vadd.f32 %v2476, %v2499
  %v2548 = vadd.f32 %v2477, %v2499
  %v2549 = vadd.f32 %v2478, %v2499
  %v2550 = vadd.f32 %v2479, %v2499
  %v2551 = vadd.f32 %v2480, %v2499
  %v2552 = vadd.f32 %v2481, %v2499
  %v2553 = vadd.f32 %v2482, %v2499
  %v2554 = vadd.f32 %v2483, %v2499
  %v2555 = vadd.f32 %v2484, %v2499
  %v2556 = vadd.f32 %v2485, %v2499
  %v2557 = vadd.f32 %v2486, %v2499
  %v2558 = vadd.f32 %v2487, %v2499
  %v2559 = vadd.f32 %v2488, %v2499
  %v2560 = vadd.f32 %v2489, %v2499
  %v2561 = vadd.f32 %v2490, %v2499
  %v2562 = vadd.f32 %v2491, %v2499
  %v2563 = vadd.f32 %v2492, %v2499
  %v2564 = vadd.f32 %v2493, %v2499
  %v2565 = vmax.f32 %v2501, 0.0
  %v2566 = vmax.f32 %v2502, 0.0
  %v2567 = vmax.f32 %v2503, 0.0
  %v2568 = vmax.f32 %v2504, 0.0
  %v2569 = vmax.f32 %v2505, 0.0
  %v2570 = vmax.f32 %v2506, 0.0
  %v2571 = vmax.f32 %v2507, 0.0
  %v2572 = vmax.f32 %v2508, 0.0
  %v2573 = vmax.f32 %v2509, 0.0
  %v2574 = vmax.f32 %v2510, 0.0
  %v2575 = vmax.f32 %v2511, 0.0
  %v2576 = vmax.f32 %v2512, 0.0
  %v2577 = vmax.f32 %v2513, 0.0
  %v2578 = vmax.f32 %v2514, 0.0
  %v2579 = vmax.f32 %v2515, 0.0
  %v2580 = vmax.f32 %v2516, 0.0
  %v2581 = vmax.f32 %v2517, 0.0
  %v2582 = vmax.f32 %v2518, 0.0
  %v2583 = vmax.f32 %v2519, 0.0
  %v2584 = vmax.f32 %v2520, 0.0
  %v2585 = vmax.f32 %v2521, 0.0
  %v2586 = vmax.f32 %v2522, 0.0
  %v2587 = vmax.f32 %v2523, 0.0
  %v2588 = vmax.f32 %v2524, 0.0
  %v2589 = vmax.f32 %v2525, 0.0
  %v2590 = vmax.f32 %v2526, 0.0
  %v2591 = vmax.f32 %v2527, 0.0
  %v2592 = vmax.f32 %v2528, 0.0
  %v2593 = vmax.f32 %v2529, 0.0
  %v2594 = vmax.f32 %v2530, 0.0
  %v2595 = vmax.f32 %v2531, 0.0
  %v2596 = vmax.f32 %v2532, 0.0
  %v2597 = vmax.f32 %v2533, 0.0
  %v2598 = vmax.f32 %v2534, 0.0
  %v2599 = vmax.f32 %v2535, 0.0
  %v2600 = vmax.f32 %v2536, 0.0
  %v2601 = vmax.f32 %v2537, 0.0
  %v2602 = vmax.f32 %v2538, 0.0
  %v2603 = vmax.f32 %v2539, 0.0
  %v2604 = vmax.f32 %v2540, 0.0
  %v2605 = vmax.f32 %v2541, 0.0
  %v2606 = vmax.f32 %v2542, 0.0
  %v2607 = vmax.f32 %v2543, 0.0
  %v2608 = vmax.f32 %v2544, 0.0
  %v2609 = vmax.f32 %v2545, 0.0
  %v2610 = vmax.f32 %v2546, 0.0
  %v2611 = vmax.f32 %v2547, 0.0
  %v2612 = vmax.f32 %v2548, 0.0
  %v2613 = vmax.f32 %v2549, 0.0
  %v2614 = vmax.f32 %v2550, 0.0
  %v2615 = vmax.f32 %v2551, 0.0
  %v2616 = vmax.f32 %v2552, 0.0
  %v2617 = vmax.f32 %v2553, 0.0
  %v2618 = vmax.f32 %v2554, 0.0
  %v2619 = vmax.f32 %v2555, 0.0
  %v2620 = vmax.f32 %v2556, 0.0
  %v2621 = vmax.f32 %v2557, 0.0
  %v2622 = vmax.f32 %v2558, 0.0
  %v2623 = vmax.f32 %v2559, 0.0
  %v2624 = vmax.f32 %v2560, 0.0
  %v2625 = vmax.f32 %v2561, 0.0
  %v2626 = vmax.f32 %v2562, 0.0
  %v2627 = vmax.f32 %v2563, 0.0
  %v2628 = vmax.f32 %v2564, 0.0
  %v2629 = vadd.s32 %v45, 128
  %v2630 = vadd.s32 %v45, 256
  %v2631 = vadd.s32 %v45, 384
  %v2632 = vlaneseq
  %v2633 = vshrl.u32 %v2632, 7
  %v2634 = vmul.u32 %v2633, 256
  %vm2635 = vcmp.ge.s32.totalorder %v45, %v2634
  %vm2636 = vcmp.ge.s32.totalorder %v2629, %v2634
  %vm2637 = vcmp.ge.s32.totalorder %v2630, %v2634
  %vm2638 = vcmp.ge.s32.totalorder %v2631, %v2634
  %v2639 = vadd.s32 %v2633, 1
  %v2640 = vmul.u32 %v2639, 256
  %vm2641 = vcmp.lt.s32.totalorder %v45, %v2640
  %vm2642 = vcmp.lt.s32.totalorder %v2629, %v2640
  %vm2643 = vcmp.lt.s32.totalorder %v2630, %v2640
  %vm2644 = vcmp.lt.s32.totalorder %v2631, %v2640
  %vm2645 = vmand %vm2635, %vm2641
  %vm2646 = vmand %vm2636, %vm2642
  %vm2647 = vmand %vm2637, %vm2643
  %vm2648 = vmand %vm2638, %vm2644
  %v2649 = vsel %vm2645, 1, 0
  %v2650 = vsel %vm2646, 1, 0
  %v2651 = vsel %vm2647, 1, 0
  %v2652 = vsel %vm2648, 1, 0
  %v2653 = vcvt.s32.f32 %v2649
  %v2654 = vcvt.s32.f32 %v2650
  %v2655 = vcvt.s32.f32 %v2651
  %v2656 = vcvt.s32.f32 %v2652
  %v2657 = vmul.f32 %v2653, 0.00390625
  %v2658 = vmul.f32 %v2654, 0.00390625
  %v2659 = vmul.f32 %v2655, 0.00390625
  %v2660 = vmul.f32 %v2656, 0.00390625
  %2661 = vmatprep.subr.mxu0 0.0
  %2662 = vmatpush1.msra.mxu0 %v2565
  %2663 = vmatprep.subr.mxu0 0.0
  %2664 = vmatpush1.msra.mxu0 %v2566
  %2665 = vmatprep.subr.mxu0 0.0
  %2666 = vmatpush1.msra.mxu0 %v2567
  %2667 = vmatprep.subr.mxu0 0.0
  %2668 = vmatpush1.msra.mxu0 %v2568
  %2669 = vmatprep.subr.mxu0 0.0
  %2670 = vmatpush1.msra.mxu0 %v2569
  %2671 = vmatprep.subr.mxu0 0.0
  %2672 = vmatpush1.msra.mxu0 %v2570
  %2673 = vmatprep.subr.mxu0 0.0
  %2674 = vmatpush1.msra.mxu0 %v2571
  %2675 = vmatprep.subr.mxu0 0.0
  %2676 = vmatpush1.msra.mxu0 %v2572
  %2677 = vmatprep.subr.mxu0 0.0
  %2678 = vmatpush1.msra.mxu0 %v2573
  %2679 = vmatprep.subr.mxu0 0.0
  %2680 = vmatpush1.msra.mxu0 %v2574
  %2681 = vmatprep.subr.mxu0 0.0
  %2682 = vmatpush1.msra.mxu0 %v2575
  %2683 = vmatprep.subr.mxu0 0.0
  %2684 = vmatpush1.msra.mxu0 %v2576
  %2685 = vmatprep.subr.mxu0 0.0
  %2686 = vmatpush1.msra.mxu0 %v2577
  %2687 = vmatprep.subr.mxu0 0.0
  %2688 = vmatpush1.msra.mxu0 %v2578
  %2689 = vmatprep.subr.mxu0 0.0
  %2690 = vmatpush1.msra.mxu0 %v2579
  %2691 = vmatprep.subr.mxu0 0.0
  %2692 = vmatpush1.msra.mxu0 %v2580
  %2693 = vmatprep.subr.mxu0 0.0
  %2694 = vmatpush1.msra.mxu0 %v2581
  %2695 = vmatprep.subr.mxu0 0.0
  %2696 = vmatpush1.msra.mxu0 %v2582
  %2697 = vmatprep.subr.mxu0 0.0
  %2698 = vmatpush1.msra.mxu0 %v2583
  %2699 = vmatprep.subr.mxu0 0.0
  %2700 = vmatpush1.msra.mxu0 %v2584
  %2701 = vmatprep.subr.mxu0 0.0
  %2702 = vmatpush1.msra.mxu0 %v2585
  %2703 = vmatprep.subr.mxu0 0.0
  %2704 = vmatpush1.msra.mxu0 %v2586
  %2705 = vmatprep.subr.mxu0 0.0
  %2706 = vmatpush1.msra.mxu0 %v2587
  %2707 = vmatprep.subr.mxu0 0.0
  %2708 = vmatpush1.msra.mxu0 %v2588
  %2709 = vmatprep.subr.mxu0 0.0
  %2710 = vmatpush1.msra.mxu0 %v2589
  %2711 = vmatprep.subr.mxu0 0.0
  %2712 = vmatpush1.msra.mxu0 %v2590
  %2713 = vmatprep.subr.mxu0 0.0
  %2714 = vmatpush1.msra.mxu0 %v2591
  %2715 = vmatprep.subr.mxu0 0.0
  %2716 = vmatpush1.msra.mxu0 %v2592
  %2717 = vmatprep.subr.mxu0 0.0
  %2718 = vmatpush1.msra.mxu0 %v2593
  %2719 = vmatprep.subr.mxu0 0.0
  %2720 = vmatpush1.msra.mxu0 %v2594
  %2721 = vmatprep.subr.mxu0 0.0
  %2722 = vmatpush1.msra.mxu0 %v2595
  %2723 = vmatprep.subr.mxu0 0.0
  %2724 = vmatpush1.msra.mxu0 %v2596
  %2725 = vmatprep.mubr.f32.mxu0 %v2658
  %2726 = vmatmul.mubr.f32.gmra.mrb[0].mxu0 %v2657
  %v2727 = vpop.f32.mrb[0].mxu0
  %v2728 = vadd.f32 0.0, %v2727
  %v2729 = vpop.f32.mrb[0].mxu0
  %2730 = vdwg.mxu0
  %2731 = vmatprep.subr.mxu0 0.0
  %2732 = vmatpush1.msra.mxu0 %v2597
  %2733 = vmatprep.subr.mxu0 0.0
  %2734 = vmatpush1.msra.mxu0 %v2598
  %2735 = vmatprep.subr.mxu0 0.0
  %2736 = vmatpush1.msra.mxu0 %v2599
  %2737 = vmatprep.subr.mxu0 0.0
  %2738 = vmatpush1.msra.mxu0 %v2600
  %2739 = vmatprep.subr.mxu0 0.0
  %2740 = vmatpush1.msra.mxu0 %v2601
  %2741 = vmatprep.subr.mxu0 0.0
  %2742 = vmatpush1.msra.mxu0 %v2602
  %2743 = vmatprep.subr.mxu0 0.0
  %2744 = vmatpush1.msra.mxu0 %v2603
  %2745 = vmatprep.subr.mxu0 0.0
  %2746 = vmatpush1.msra.mxu0 %v2604
  %2747 = vmatprep.subr.mxu0 0.0
  %2748 = vmatpush1.msra.mxu0 %v2605
  %2749 = vmatprep.subr.mxu0 0.0
  %2750 = vmatpush1.msra.mxu0 %v2606
  %2751 = vmatprep.subr.mxu0 0.0
  %2752 = vmatpush1.msra.mxu0 %v2607
  %2753 = vmatprep.subr.mxu0 0.0
  %2754 = vmatpush1.msra.mxu0 %v2608
  %2755 = vmatprep.subr.mxu0 0.0
  %2756 = vmatpush1.msra.mxu0 %v2609
  %2757 = vmatprep.subr.mxu0 0.0
  %2758 = vmatpush1.msra.mxu0 %v2610
  %2759 = vmatprep.subr.mxu0 0.0
  %2760 = vmatpush1.msra.mxu0 %v2611
  %2761 = vmatprep.subr.mxu0 0.0
  %2762 = vmatpush1.msra.mxu0 %v2612
  %2763 = vmatprep.subr.mxu0 0.0
  %2764 = vmatpush1.msra.mxu0 %v2613
  %2765 = vmatprep.subr.mxu0 0.0
  %2766 = vmatpush1.msra.mxu0 %v2614
  %2767 = vmatprep.subr.mxu0 0.0
  %2768 = vmatpush1.msra.mxu0 %v2615
  %2769 = vmatprep.subr.mxu0 0.0
  %2770 = vmatpush1.msra.mxu0 %v2616
  %2771 = vmatprep.subr.mxu0 0.0
  %2772 = vmatpush1.msra.mxu0 %v2617
  %2773 = vmatprep.subr.mxu0 0.0
  %2774 = vmatpush1.msra.mxu0 %v2618
  %2775 = vmatprep.subr.mxu0 0.0
  %2776 = vmatpush1.msra.mxu0 %v2619
  %2777 = vmatprep.subr.mxu0 0.0
  %2778 = vmatpush1.msra.mxu0 %v2620
  %2779 = vmatprep.subr.mxu0 0.0
  %2780 = vmatpush1.msra.mxu0 %v2621
  %2781 = vmatprep.subr.mxu0 0.0
  %2782 = vmatpush1.msra.mxu0 %v2622
  %2783 = vmatprep.subr.mxu0 0.0
  %2784 = vmatpush1.msra.mxu0 %v2623
  %2785 = vmatprep.subr.mxu0 0.0
  %2786 = vmatpush1.msra.mxu0 %v2624
  %2787 = vmatprep.subr.mxu0 0.0
  %2788 = vmatpush1.msra.mxu0 %v2625
  %2789 = vmatprep.subr.mxu0 0.0
  %2790 = vmatpush1.msra.mxu0 %v2626
  %2791 = vmatprep.subr.mxu0 0.0
  %2792 = vmatpush1.msra.mxu0 %v2627
  %2793 = vmatprep.subr.mxu0 0.0
  %2794 = vmatpush1.msra.mxu0 %v2628
  %2795 = vmatprep.mubr.f32.mxu0 %v2660
  %2796 = vmatmul.mubr.f32.gmra.mrb[0].mxu0 %v2659
  %v2797 = vpop.f32.mrb[0].mxu0
  %v2798 = vadd.f32 %v2728, %v2797
  %v2799 = vpop.f32.mrb[0].mxu0
  %2800 = vdwg.mxu0
  %v2801 = vld [vmem:[%s9] sm:$0xff]
  %v2802 = vld [vmem:[%s9 + $0x8] sm:$0xff]
  %v2803 = vld [vmem:[%s9 + $0x10] sm:$0xff]
  %v2804 = vld [vmem:[%s9 + $0x18] sm:$0xff]
  %v2805 = vld [vmem:[%s10] sm:$0x1]
  %v2807 = vlaneseq
  %v2808 = vshrl.u32 %v2807, 7
  %v2809 = vsub.s32 0, %v2808
  %v2810 = vrot.slane %v2805, %v2809
  %v2813 = vsel %vm1724, %v2798, 0
  %2815 = vmatprep.subr.mxu0 0.0
  %2816 = vmatpush1.msra.mxu0 %v2801
  %2817 = vmatprep.subr.mxu0 0.0
  %2818 = vmatpush1.msra.mxu0 %v2802
  %2819 = vmatprep.subr.mxu0 0.0
  %2820 = vmatpush1.msra.mxu0 %v2803
  %2821 = vmatprep.subr.mxu0 0.0
  %2822 = vmatpush1.msra.mxu0 %v2804
  %2823 = vmatprep.subr.mxu0 0.0
  %2824 = vmatpush1.msra.mxu0 0.0
  %2825 = vmatprep.subr.mxu0 0.0
  %2826 = vmatpush1.msra.mxu0 0.0
  %2827 = vmatprep.subr.mxu0 0.0
  %2828 = vmatpush1.msra.mxu0 0.0
  %2829 = vmatprep.subr.mxu0 0.0
  %2830 = vmatpush1.msra.mxu0 0.0
  %2831 = vmatprep.subr.mxu0 0.0
  %2832 = vmatpush1.msra.mxu0 0.0
  %2833 = vmatprep.subr.mxu0 0.0
  %2834 = vmatpush1.msra.mxu0 0.0
  %2835 = vmatprep.subr.mxu0 0.0
  %2836 = vmatpush1.msra.mxu0 0.0
  %2837 = vmatprep.subr.mxu0 0.0
  %2838 = vmatpush1.msra.mxu0 0.0
  %2839 = vmatprep.subr.mxu0 0.0
  %2840 = vmatpush1.msra.mxu0 0.0
  %2841 = vmatprep.subr.mxu0 0.0
  %2842 = vmatpush1.msra.mxu0 0.0
  %2843 = vmatprep.subr.mxu0 0.0
  %2844 = vmatpush1.msra.mxu0 0.0
  %2845 = vmatprep.subr.mxu0 0.0
  %2846 = vmatpush1.msra.mxu0 0.0
  %2847 = vmatprep.subr.mxu0 0.0
  %2848 = vmatpush1.msra.mxu0 0.0
  %2849 = vmatprep.subr.mxu0 0.0
  %2850 = vmatpush1.msra.mxu0 0.0
  %2851 = vmatprep.subr.mxu0 0.0
  %2852 = vmatpush1.msra.mxu0 0.0
  %2853 = vmatprep.subr.mxu0 0.0
  %2854 = vmatpush1.msra.mxu0 0.0
  %2855 = vmatprep.subr.mxu0 0.0
  %2856 = vmatpush1.msra.mxu0 0.0
  %2857 = vmatprep.subr.mxu0 0.0
  %2858 = vmatpush1.msra.mxu0 0.0
  %2859 = vmatprep.subr.mxu0 0.0
  %2860 = vmatpush1.msra.mxu0 0.0
  %2861 = vmatprep.subr.mxu0 0.0
  %2862 = vmatpush1.msra.mxu0 0.0
  %2863 = vmatprep.subr.mxu0 0.0
  %2864 = vmatpush1.msra.mxu0 0.0
  %2865 = vmatprep.subr.mxu0 0.0
  %2866 = vmatpush1.msra.mxu0 0.0
  %2867 = vmatprep.subr.mxu0 0.0
  %2868 = vmatpush1.msra.mxu0 0.0
  %2869 = vmatprep.subr.mxu0 0.0
  %2870 = vmatpush1.msra.mxu0 0.0
  %2871 = vmatprep.subr.mxu0 0.0
  %2872 = vmatpush1.msra.mxu0 0.0
  %2873 = vmatprep.subr.mxu0 0.0
  %2874 = vmatpush1.msra.mxu0 0.0
  %2875 = vmatprep.subr.mxu0 0.0
  %2876 = vmatpush1.msra.mxu0 0.0
  %2877 = vmatprep.subr.mxu0 0.0
  %2878 = vmatpush1.msra.mxu0 0.0
  %2879 = vmatprep.mubr.f32.mxu0 0.0
  %2880 = vmatmul.mubr.f32.gmra.mrb[0].mxu0 %v2813
  %v2881 = vpop.f32.mrb[0].mxu0
  %v2882 = vadd.f32 %v2810, %v2881
  %v2883 = vpop.f32.mrb[0].mxu0
  %2884 = vdwg.mxu0
  %v2885 = vmax.f32 %v2882, 0.0
  %v2886 = vld [vmem:[%s11] sm:$0xff]
  %v2887 = vld [vmem:[%s11 + $0x8] sm:$0xff]
  %v2888 = vld [vmem:[%s11 + $0x10] sm:$0xff]
  %v2889 = vld [vmem:[%s11 + $0x18] sm:$0xff]
  %v2890 = vld [vmem:[%s11 + $0x20] sm:$0xff]
  %v2891 = vld [vmem:[%s11 + $0x28] sm:$0xff]
  %v2892 = vld [vmem:[%s11 + $0x30] sm:$0xff]
  %v2893 = vld [vmem:[%s11 + $0x38] sm:$0xff]
  %v2894 = vld [vmem:[%s11 + $0x40] sm:$0xff]
  %v2895 = vld [vmem:[%s11 + $0x48] sm:$0xff]
  %v2896 = vld [vmem:[%s11 + $0x50] sm:$0xff]
  %v2897 = vld [vmem:[%s11 + $0x58] sm:$0xff]
  %v2898 = vld [vmem:[%s11 + $0x60] sm:$0xff]
  %v2899 = vld [vmem:[%s11 + $0x68] sm:$0xff]
  %v2900 = vld [vmem:[%s11 + $0x70] sm:$0xff]
  %v2901 = vld [vmem:[%s11 + $0x78] sm:$0xff]
  %v2902 = vld [vmem:[%s12] sm:$0x1]
  %v2904 = vlaneseq
  %v2905 = vshrl.u32 %v2904, 7
  %v2906 = vsub.s32 0, %v2905
  %v2907 = vrot.slane %v2902, %v2906
  %2909 = vmatprep.subr.mxu0 0.0
  %2910 = vmatpush1.msra.mxu0 %v2886
  %2911 = vmatprep.subr.mxu0 0.0
  %2912 = vmatpush1.msra.mxu0 %v2887
  %2913 = vmatprep.subr.mxu0 0.0
  %2914 = vmatpush1.msra.mxu0 %v2888
  %2915 = vmatprep.subr.mxu0 0.0
  %2916 = vmatpush1.msra.mxu0 %v2889
  %2917 = vmatprep.subr.mxu0 0.0
  %2918 = vmatpush1.msra.mxu0 %v2890
  %2919 = vmatprep.subr.mxu0 0.0
  %2920 = vmatpush1.msra.mxu0 %v2891
  %2921 = vmatprep.subr.mxu0 0.0
  %2922 = vmatpush1.msra.mxu0 %v2892
  %2923 = vmatprep.subr.mxu0 0.0
  %2924 = vmatpush1.msra.mxu0 %v2893
  %2925 = vmatprep.subr.mxu0 0.0
  %2926 = vmatpush1.msra.mxu0 %v2894
  %2927 = vmatprep.subr.mxu0 0.0
  %2928 = vmatpush1.msra.mxu0 %v2895
  %2929 = vmatprep.subr.mxu0 0.0
  %2930 = vmatpush1.msra.mxu0 %v2896
  %2931 = vmatprep.subr.mxu0 0.0
  %2932 = vmatpush1.msra.mxu0 %v2897
  %2933 = vmatprep.subr.mxu0 0.0
  %2934 = vmatpush1.msra.mxu0 %v2898
  %2935 = vmatprep.subr.mxu0 0.0
  %2936 = vmatpush1.msra.mxu0 %v2899
  %2937 = vmatprep.subr.mxu0 0.0
  %2938 = vmatpush1.msra.mxu0 %v2900
  %2939 = vmatprep.subr.mxu0 0.0
  %2940 = vmatpush1.msra.mxu0 %v2901
  %2941 = vmatprep.subr.mxu0 0.0
  %2942 = vmatpush1.msra.mxu0 0.0
  %2943 = vmatprep.subr.mxu0 0.0
  %2944 = vmatpush1.msra.mxu0 0.0
  %2945 = vmatprep.subr.mxu0 0.0
  %2946 = vmatpush1.msra.mxu0 0.0
  %2947 = vmatprep.subr.mxu0 0.0
  %2948 = vmatpush1.msra.mxu0 0.0
  %2949 = vmatprep.subr.mxu0 0.0
  %2950 = vmatpush1.msra.mxu0 0.0
  %2951 = vmatprep.subr.mxu0 0.0
  %2952 = vmatpush1.msra.mxu0 0.0
  %2953 = vmatprep.subr.mxu0 0.0
  %2954 = vmatpush1.msra.mxu0 0.0
  %2955 = vmatprep.subr.mxu0 0.0
  %2956 = vmatpush1.msra.mxu0 0.0
  %2957 = vmatprep.subr.mxu0 0.0
  %2958 = vmatpush1.msra.mxu0 0.0
  %2959 = vmatprep.subr.mxu0 0.0
  %2960 = vmatpush1.msra.mxu0 0.0
  %2961 = vmatprep.subr.mxu0 0.0
  %2962 = vmatpush1.msra.mxu0 0.0
  %2963 = vmatprep.subr.mxu0 0.0
  %2964 = vmatpush1.msra.mxu0 0.0
  %2965 = vmatprep.subr.mxu0 0.0
  %2966 = vmatpush1.msra.mxu0 0.0
  %2967 = vmatprep.subr.mxu0 0.0
  %2968 = vmatpush1.msra.mxu0 0.0
  %2969 = vmatprep.subr.mxu0 0.0
  %2970 = vmatpush1.msra.mxu0 0.0
  %2971 = vmatprep.subr.mxu0 0.0
  %2972 = vmatpush1.msra.mxu0 0.0
  %2973 = vmatprep.mubr.f32.mxu0 0.0
  %2974 = vmatmul.mubr.f32.gmra.mrb[0].mxu0 %v2885
  %v2975 = vpop.f32.mrb[0].mxu0
  %v2976 = vadd.f32 %v2907, %v2975
  %v2977 = vpop.f32.mrb[0].mxu0
  %2978 = vdwg.mxu0
  %2979 = vst [vmem:[%s13] sm:$0x3] %v2976
  // Predicated region
  $region54: #{decent2fine_forward.1} parent=0 // pred_check
    _
  $region55: #{decent2fine_forward.1} parent=0 // pred_check_branch
    %2981 = sbr.rel (0) target = $region57
  $region56: #{decent2fine_forward.1} parent=0 // pred_region
    _
  $region57: #{decent2fine_forward.1} parent=0 // pred_fallthru
    _
  // Predicated region
  $region58: #{decent2fine_forward.1} parent=0 // pred_check
    _
  $region59: #{decent2fine_forward.1} parent=0 // pred_check_branch
    %2983 = sbr.rel (0) target = $region61
  $region60: #{decent2fine_forward.1} parent=0 // pred_region
    _
  $region61: #{decent2fine_forward.1} parent=0 // pred_fallthru
    _

</llo_original>
